<compile_context>
chip_gen: v5e
topology: v5e:2x2
jax: 0.10.0
libtpu: 0.0.40
codegen_flags: <defaults>
</compile_context>

<pallas_src>
import math
import functools

import jax
import jax.numpy as jnp
from jax import lax
from jax.experimental import pallas as pl
from jax.experimental.pallas import tpu as pltpu


def _round_up(x, m):
    return ((x + m - 1) // m) * m


def _vmem_capacity_bytes():
    try:
        cap = getattr(pltpu.get_tpu_info(), "vmem_capacity_bytes", None)
        if cap:
            return int(cap)
    except Exception:
        pass
    return 64 * 1024 * 1024   # conservative: v7x per-TensorCore VMEM


def _num_tensorcores():
    for probe in (
        lambda: int(getattr(pltpu.get_tpu_info(), "num_cores")),
        lambda: int(getattr(jax.devices()[0], "num_cores")),
    ):
        try:
            n = probe()
            if n and n > 0:
                return n
        except Exception:
            pass
    return 1


# ----------------------------------------------------------------------------
# Fused kernel: one grid step == B_TILE batch elements.
# ----------------------------------------------------------------------------
def _encoder_layer_kernel(
    x_ref,        # (B_TILE, L, C_pad)  bf16
    wqkv_ref,     # (C_pad, 3*C_pad)    bf16   [Wq | Wk | Wv]
    wo_ref,       # (C_pad, C_pad)      bf16
    w1_ref,       # (C_pad, F_pad)      bf16   conv1 (kernel_size=1)
    w2_ref,       # (F_pad, C_pad)      bf16   conv2 (kernel_size=1)
    bqkv_ref,     # (1, 3*C_pad)        f32    [bq | bk | bv]
    b1_ref,       # (1, F_pad)          f32
    pvec_ref,     # (8, C_pad)          f32    rows: bo, b2, g1, be1, g2, be2, mask, 0
    o_ref,        # (B_TILE, L, C_pad)  out_dtype
    *, d_model, c_pad, f_tile, n_f,
):
    bt, L, _ = x_ref.shape
    rows = bt * L
    inv_c = 1.0 / float(d_model)
    scale = 1.0 / math.sqrt(float(d_model))
    eps = 1e-5
    bf16, f32 = jnp.bfloat16, jnp.float32

    pv = pvec_ref[...]
    bo, b2 = pv[0:1, :], pv[1:2, :]
    g1, be1 = pv[2:3, :], pv[3:4, :]
    g2, be2 = pv[4:5, :], pv[5:6, :]
    lane_mask = pv[6:7, :]                       # 1.0 for real feature lanes

    def layernorm(v2d, gamma, beta):
        # Two-pass (x - mu) variance; padded lanes are masked out of the
        # centered values so the stats use exactly d_model real lanes.
        mu = jnp.sum(v2d, axis=-1, keepdims=True) * inv_c
        d = (v2d - mu) * lane_mask
        var = jnp.sum(d * d, axis=-1, keepdims=True) * inv_c
        # gamma/beta are zero in padded lanes -> padded output lanes stay 0.
        return d * lax.rsqrt(var + eps) * gamma + beta

    xb = x_ref[...]                              # (bt, L, C_pad) bf16
    xf = xb.reshape(rows, c_pad)                 # (rows, C_pad)  bf16

    # ---- fused QKV projection: one wide bf16 MXU matmul, f32 accumulation ---
    qkv = jnp.dot(xf, wqkv_ref[...], preferred_element_type=f32) + bqkv_ref[...]
    qkv = qkv.reshape(bt, L, 3 * c_pad)
    # fold the 1/sqrt(d) scale into q (cheaper than scaling the (bt,L,L) scores)
    q = (qkv[:, :, 0 * c_pad:1 * c_pad] * scale).astype(bf16)
    k = qkv[:, :, 1 * c_pad:2 * c_pad].astype(bf16)
    v = qkv[:, :, 2 * c_pad:3 * c_pad].astype(bf16)

    # ---- scaled dot-product attention (bf16 operands, f32 accumulation) -----
    # TODO(synk): for L >= ~512, stream the key axis flash-style instead of
    # holding the (bt, L, L) f32 score tensor.
    s = jnp.einsum("bld,bmd->blm", q, k, preferred_element_type=f32)    # (bt,L,L)
    s_max = jnp.max(s, axis=-1, keepdims=True)
    p = jnp.exp(s - s_max)
    p = p * pl.reciprocal(jnp.sum(p, axis=-1, keepdims=True), approx=True)
    ctx = jnp.einsum("blm,bmd->bld", p.astype(bf16), v,
                     preferred_element_type=f32)                        # (bt,L,C_pad)
    ctx = ctx.reshape(rows, c_pad)

    attn = jnp.dot(ctx.astype(bf16), wo_ref[...],
                   preferred_element_type=f32) + bo                     # (rows,C_pad)

    # ---- residual + norm1 (dropout = identity, eval mode) -------------------
    # NOTE: the residual uses the bf16-cast x (padded input), trading a tiny
    # precision loss for half the activation DMA bytes.
    x1 = xf.astype(f32) + attn
    xn = layernorm(x1, g1, be1)
    xn_b = xn.astype(bf16)

    # ---- pointwise FFN (conv1 k=1 -> relu -> conv2 k=1), F-axis tiled -------
    if n_f == 1:
        h = jnp.dot(xn_b, w1_ref[...], preferred_element_type=f32) + b1_ref[...]
        h = jnp.maximum(h, 0.0)
        y = jnp.dot(h.astype(bf16), w2_ref[...], preferred_element_type=f32)
    else:
        def ffn_chunk(i, acc):
            off = pl.multiple_of(i * f_tile, f_tile)
            hc = jnp.dot(xn_b, w1_ref[:, pl.ds(off, f_tile)],
                         preferred_element_type=f32)
            hc = jnp.maximum(hc + b1_ref[:, pl.ds(off, f_tile)], 0.0)
            return acc + jnp.dot(hc.astype(bf16), w2_ref[pl.ds(off, f_tile), :],
                                 preferred_element_type=f32)
        y = lax.fori_loop(0, n_f, ffn_chunk, jnp.zeros((rows, c_pad), f32))
    y = y + b2

    # ---- residual + norm2 ----------------------------------------------------
    out = layernorm(xn + y, g2, be2)
    o_ref[...] = out.reshape(bt, L, c_pad).astype(o_ref.dtype)


# ----------------------------------------------------------------------------
# Host-side wrapper: pad to lane-dense layout, pack small params, tile batch.
# ----------------------------------------------------------------------------
def _pad2(a, r, c):
    out = jnp.zeros((r, c), a.dtype)
    return out.at[: a.shape[0], : a.shape[1]].set(a)


def _choose_bt_and_vmem(N, L, C_pad, F_pad, f_tile, weight_bytes, out_itemsize,
                        num_cores):
    hw_vmem = _vmem_capacity_bytes()
    budget = min(int(hw_vmem * 0.85), 112 * 1024 * 1024)

    def step_bytes(bt):
        rows = bt * L
        io = 2 * rows * C_pad * 2 + 2 * rows * C_pad * out_itemsize   # 2-buffered x/out
        att = 2 * bt * L * L * 4                                      # scores + probs f32
        interm = rows * 3 * C_pad * 4 + 4 * rows * C_pad * 4 + rows * f_tile * 4
        return io + att + interm

    # Single-TC chips: maximize the row slab (grid is a serial loop, extra
    # steps are pure overhead).  Multi-TC: keep >= num_cores steps (megacore).
    target_rows = 1024 if num_cores <= 1 else 512
    cap = max(1, target_rows // max(1, L))
    if num_cores >= 2 and N >= num_cores:
        cap = min(cap, max(1, N // num_cores))
    cap = min(cap, N)

    bt = 1
    for d in range(1, cap + 1):
        if N % d == 0 and weight_bytes + step_bytes(d) <= budget:
            bt = d

    need = 2 * weight_bytes + step_bytes(bt)     # 2x weights: covers fallback buffering
    vmem_limit = int(need * 1.25) + (4 << 20)    # headroom for spills / pipeline state
    vmem_limit = max(vmem_limit, 32 << 20)
    vmem_limit = min(vmem_limit, budget)
    return bt, vmem_limit


def encoder_layer_forward(x, params, *, block_batch=None, out_dtype=jnp.float32):
    """x: (N, L, C) float32 -> (N, L, C) out_dtype (default float32)."""
    N, L, C = x.shape
    F = params["w1"].shape[1]
    # NOTE: this kernel is only efficient for C >= 128; smaller C is padded to
    # 128 lanes and the projection matmuls waste the padded contraction lanes.
    C_pad = _round_up(C, 128)

    F_TILE_MAX = 2048
    F_pad = _round_up(F, 128)
    if F_pad > F_TILE_MAX:
        f_tile = F_TILE_MAX
        F_pad = _round_up(F_pad, f_tile)
    else:
        f_tile = F_pad
    n_f = F_pad // f_tile

    bf16 = jnp.bfloat16
    # weights: pad once on host, cast to bf16 (halves DMA bytes, bf16 MXU rate)
    wqkv = jnp.concatenate(
        [_pad2(params["wq"], C_pad, C_pad),
         _pad2(params["wk"], C_pad, C_pad),
         _pad2(params["wv"], C_pad, C_pad)], axis=1).astype(bf16)   # (C_pad, 3C_pad)
    wo = _pad2(params["wo"], C_pad, C_pad).astype(bf16)
    w1 = _pad2(params["w1"], C_pad, F_pad).astype(bf16)
    w2 = _pad2(params["w2"], F_pad, C_pad).astype(bf16)

    # small vectors: packed into 3 arrays (fewer DMA descriptors)
    bqkv = jnp.concatenate(
        [_pad2(params["bq"], 1, C_pad),
         _pad2(params["bk"], 1, C_pad),
         _pad2(params["bv"], 1, C_pad)], axis=1)                    # (1, 3C_pad) f32
    b1 = _pad2(params["b1"], 1, F_pad)                              # (1, F_pad)  f32
    pvec = jnp.zeros((8, C_pad), jnp.float32)
    pvec = pvec.at[0, :C].set(params["bo"][0])
    pvec = pvec.at[1, :C].set(params["b2"][0])
    pvec = pvec.at[2, :C].set(params["gamma1"][0])
    pvec = pvec.at[3, :C].set(params["beta1"][0])
    pvec = pvec.at[4, :C].set(params["gamma2"][0])
    pvec = pvec.at[5, :C].set(params["beta2"][0])
    pvec = pvec.at[6, :C].set(1.0)                                  # lane mask

    # activations: cast to bf16; skip the pad copy when already lane-dense
    if C_pad == C:
        x_p = x.astype(bf16)
    else:
        x_p = jnp.zeros((N, L, C_pad), bf16).at[:, :, :C].set(x.astype(bf16))

    weight_bytes = ((wqkv.size + wo.size + w1.size + w2.size) * 2
                    + (bqkv.size + b1.size + pvec.size) * 4)
    out_itemsize = jnp.dtype(out_dtype).itemsize
    num_cores = _num_tensorcores()
    bt, vmem_limit = _choose_bt_and_vmem(
        N, L, C_pad, F_pad, f_tile, weight_bytes, out_itemsize, num_cores)
    if block_batch is not None:
        bt = block_batch
    assert N % bt == 0
    grid_n = N // bt

    kernel = functools.partial(_encoder_layer_kernel, d_model=C, c_pad=C_pad,
                               f_tile=f_tile, n_f=n_f)

    def build(single_buffer_weights):
        def wspec(shape):
            idx = lambda b: (0,) * len(shape)
            if single_buffer_weights:
                try:
                    # constant index maps -> one buffer is enough; halves the
                    # weight VMEM footprint.
                    return pl.BlockSpec(shape, idx, pipeline_mode=pl.Buffered(1))
                except TypeError:
                    pass
            return pl.BlockSpec(shape, idx)

        in_specs = [
            pl.BlockSpec((bt, L, C_pad), lambda b: (b, 0, 0)),   # x
            wspec((C_pad, 3 * C_pad)),                           # wqkv
            wspec((C_pad, C_pad)),                               # wo
            wspec((C_pad, F_pad)),                               # w1
            wspec((F_pad, C_pad)),                               # w2
            wspec((1, 3 * C_pad)),                               # bqkv
            wspec((1, F_pad)),                                   # b1
            wspec((8, C_pad)),                                   # packed bo/b2/LN/mask
        ]
        return pl.pallas_call(
            kernel,
            out_shape=jax.ShapeDtypeStruct((N, L, C_pad), out_dtype),
            grid=(grid_n,),
            in_specs=in_specs,
            out_specs=pl.BlockSpec((bt, L, C_pad), lambda b: (b, 0, 0)),
            compiler_params=pltpu.CompilerParams(
                dimension_semantics=("parallel",),
                vmem_limit_bytes=vmem_limit,
            ),
        )

    args = (x_p, wqkv, wo, w1, w2, bqkv, b1, pvec)
    try:
        out_pad = build(True)(*args)
    except Exception:
        # fall back to default (double-buffered) weight specs
        out_pad = build(False)(*args)

    if C_pad == C:
        return out_pad
    return out_pad[:, :, :C]


# ----------------------------------------------------------------------------
# Pure-JAX f32 reference (mirrors the PyTorch forward in eval mode).
# ----------------------------------------------------------------------------
def encoder_layer_ref(x, params):
    C = x.shape[-1]
    eps = 1e-5

    def ln(v, g, b):
        mu = v.mean(-1, keepdims=True)
        var = ((v - mu) ** 2).mean(-1, keepdims=True)
        return (v - mu) / jnp.sqrt(var + eps) * g + b

    q = x @ params["wq"] + params["bq"]
    k = x @ params["wk"] + params["bk"]
    v = x @ params["wv"] + params["bv"]
    s = jnp.einsum("nld,nmd->nlm", q, k) / math.sqrt(C)
    p = jax.nn.softmax(s, axis=-1)
    attn = jnp.einsum("nlm,nmd->nld", p, v) @ params["wo"] + params["bo"]

    x1 = x + attn
    xn = ln(x1, params["gamma1"], params["beta1"])
    h = jnp.maximum(xn @ params["w1"] + params["b1"], 0.0)
    y = h @ params["w2"] + params["b2"]
    return ln(xn + y, params["gamma2"], params["beta2"])


# ----------------------------------------------------------------------------
def make_params(key, d_model, d_ff):
    ks = jax.random.split(key, 8)
    sc_m = 1.0 / math.sqrt(d_model)
    sc_f = 1.0 / math.sqrt(d_ff)
    return {
        "wq": jax.random.normal(ks[0], (d_model, d_model), jnp.float32) * sc_m,
        "wk": jax.random.normal(ks[1], (d_model, d_model), jnp.float32) * sc_m,
        "wv": jax.random.normal(ks[2], (d_model, d_model), jnp.float32) * sc_m,
        "wo": jax.random.normal(ks[3], (d_model, d_model), jnp.float32) * sc_m,
        "w1": jax.random.normal(ks[4], (d_model, d_ff), jnp.float32) * sc_m,
        "w2": jax.random.normal(ks[5], (d_ff, d_model), jnp.float32) * sc_f,
        "bq": jax.random.normal(ks[6], (1, d_model), jnp.float32) * 0.02,
        "bk": jnp.zeros((1, d_model), jnp.float32),
        "bv": jnp.zeros((1, d_model), jnp.float32),
        "bo": jnp.zeros((1, d_model), jnp.float32),
        "b1": jax.random.normal(ks[7], (1, d_ff), jnp.float32) * 0.02,
        "b2": jnp.zeros((1, d_model), jnp.float32),
        "gamma1": jnp.ones((1, d_model), jnp.float32),
        "beta1": jnp.zeros((1, d_model), jnp.float32),
        "gamma2": jnp.ones((1, d_model), jnp.float32),
        "beta2": jnp.zeros((1, d_model), jnp.float32),
    }


if __name__ == "__main__":
    N, L, d_model = 2, 8, 32
    d_ff = 4 * d_model  # 128

    key = jax.random.PRNGKey(0)
    kx, kp = jax.random.split(key)
    x = jax.random.normal(kx, (N, L, d_model), jnp.float32)
    params = make_params(kp, d_model, d_ff)

    out = encoder_layer_forward(x, params)
    out = jax.block_until_ready(out)

    ref = encoder_layer_ref(x, params)
    assert out.shape == (N, L, d_model)
    # bf16 weights/activations inside the kernel (f32 accumulation) => relaxed
    # tolerance vs the pure-f32 reference.
    assert jnp.allclose(out, ref, atol=5e-2, rtol=5e-2), "mismatch vs JAX reference"

    # TODO(synk): dropout is identity here (eval mode); training-mode dropout
    # would need pltpu.prng_* inside the kernel.
    print("KERNEL_OK")
</pallas_src>

<mosaic_0001>
module attributes {stable_mosaic.version = 11 : i64} {
  func.func @_encoder_layer_kernel(%arg0: i32, %arg1: memref<2x8x128xbf16, #tpu.memory_space<vmem>>, %arg2: memref<128x384xbf16, #tpu.memory_space<vmem>>, %arg3: memref<128x128xbf16, #tpu.memory_space<vmem>>, %arg4: memref<128x128xbf16, #tpu.memory_space<vmem>>, %arg5: memref<128x128xbf16, #tpu.memory_space<vmem>>, %arg6: memref<1x384xf32, #tpu.memory_space<vmem>>, %arg7: memref<1x128xf32, #tpu.memory_space<vmem>>, %arg8: memref<8x128xf32, #tpu.memory_space<vmem>>, %arg9: memref<2x8x128xf32, #tpu.memory_space<vmem>>) attributes {dimension_semantics = [#tpu.dimension_semantics<parallel>], iteration_bounds = array<i64: 1>, scalar_prefetch = 0 : i64, scratch_operands = 0 : i64, tpu.core_type = #tpu.core_type<tc>, window_params = [{transform_indices = @transform_0, window_bounds = array<i64: 2, 8, 128>}, {pipeline_mode = #tpu.pipeline_mode<synchronous>, transform_indices = @transform_1, window_bounds = array<i64: 128, 384>}, {pipeline_mode = #tpu.pipeline_mode<synchronous>, transform_indices = @transform_2, window_bounds = array<i64: 128, 128>}, {pipeline_mode = #tpu.pipeline_mode<synchronous>, transform_indices = @transform_3, window_bounds = array<i64: 128, 128>}, {pipeline_mode = #tpu.pipeline_mode<synchronous>, transform_indices = @transform_4, window_bounds = array<i64: 128, 128>}, {pipeline_mode = #tpu.pipeline_mode<synchronous>, transform_indices = @transform_5, window_bounds = array<i64: 1, 384>}, {pipeline_mode = #tpu.pipeline_mode<synchronous>, transform_indices = @transform_6, window_bounds = array<i64: 1, 128>}, {pipeline_mode = #tpu.pipeline_mode<synchronous>, transform_indices = @transform_7, window_bounds = array<i64: 8, 128>}, {transform_indices = @transform_8, window_bounds = array<i64: 2, 8, 128>}]} {
    %c0 = arith.constant 0 : index
    %c0_0 = arith.constant 0 : index
    %0 = vector.load %arg8[%c0, %c0_0] : memref<8x128xf32, #tpu.memory_space<vmem>>, vector<8x128xf32>
    %1 = vector.extract_strided_slice %0 {offsets = [0, 0], sizes = [1, 128], strides = [1, 1]} : vector<8x128xf32> to vector<1x128xf32>
    %2 = vector.extract_strided_slice %0 {offsets = [1, 0], sizes = [1, 128], strides = [1, 1]} : vector<8x128xf32> to vector<1x128xf32>
    %3 = vector.extract_strided_slice %0 {offsets = [2, 0], sizes = [1, 128], strides = [1, 1]} : vector<8x128xf32> to vector<1x128xf32>
    %4 = vector.extract_strided_slice %0 {offsets = [3, 0], sizes = [1, 128], strides = [1, 1]} : vector<8x128xf32> to vector<1x128xf32>
    %5 = vector.extract_strided_slice %0 {offsets = [4, 0], sizes = [1, 128], strides = [1, 1]} : vector<8x128xf32> to vector<1x128xf32>
    %6 = vector.extract_strided_slice %0 {offsets = [5, 0], sizes = [1, 128], strides = [1, 1]} : vector<8x128xf32> to vector<1x128xf32>
    %7 = vector.extract_strided_slice %0 {offsets = [6, 0], sizes = [1, 128], strides = [1, 1]} : vector<8x128xf32> to vector<1x128xf32>
    %c0_1 = arith.constant 0 : index
    %c0_2 = arith.constant 0 : index
    %c0_3 = arith.constant 0 : index
    %8 = vector.load %arg1[%c0_1, %c0_2, %c0_3] : memref<2x8x128xbf16, #tpu.memory_space<vmem>>, vector<2x8x128xbf16>
    %9 = vector.shape_cast %8 : vector<2x8x128xbf16> to vector<16x128xbf16>
    %c0_4 = arith.constant 0 : index
    %c0_5 = arith.constant 0 : index
    %10 = vector.load %arg2[%c0_4, %c0_5] : memref<128x384xbf16, #tpu.memory_space<vmem>>, vector<128x384xbf16>
    %cst = arith.constant dense<0.000000e+00> : vector<16x384xf32>
    %11 = tpu.matmul %9, %10, %cst {dimension_numbers = #tpu.dot_dimension_numbers<[1], [0], [0], [1], [0, 0, 1, 1], [], []>} : vector<16x128xbf16>, vector<128x384xbf16>, vector<16x384xf32> -> vector<16x384xf32>
    %c0_6 = arith.constant 0 : index
    %c0_7 = arith.constant 0 : index
    %12 = vector.load %arg6[%c0_6, %c0_7] : memref<1x384xf32, #tpu.memory_space<vmem>>, vector<1x384xf32>
    %13 = vector.broadcast %12 : vector<1x384xf32> to vector<16x384xf32>
    %14 = arith.addf %11, %13 : vector<16x384xf32>
    %15 = vector.shape_cast %14 : vector<16x384xf32> to vector<2x8x384xf32>
    %16 = vector.extract_strided_slice %15 {offsets = [0, 0, 0], sizes = [2, 8, 128], strides = [1, 1, 1]} : vector<2x8x384xf32> to vector<2x8x128xf32>
    %cst_8 = arith.constant 0.176776692 : f32
    %17 = vector.broadcast %cst_8 : f32 to vector<2x8x128xf32>
    %18 = arith.mulf %16, %17 : vector<2x8x128xf32>
    %19 = arith.truncf %18 : vector<2x8x128xf32> to vector<2x8x128xbf16>
    %20 = vector.extract_strided_slice %15 {offsets = [0, 0, 128], sizes = [2, 8, 128], strides = [1, 1, 1]} : vector<2x8x384xf32> to vector<2x8x128xf32>
    %21 = arith.truncf %20 : vector<2x8x128xf32> to vector<2x8x128xbf16>
    %22 = vector.extract_strided_slice %15 {offsets = [0, 0, 256], sizes = [2, 8, 128], strides = [1, 1, 1]} : vector<2x8x384xf32> to vector<2x8x128xf32>
    %23 = arith.truncf %22 : vector<2x8x128xf32> to vector<2x8x128xbf16>
    "tpu.trace_start"() <{level = 10 : i32, message = "bld,bmd->blm"}> : () -> ()
    %cst_9 = arith.constant dense<0.000000e+00> : vector<2x8x8xf32>
    %24 = tpu.matmul %19, %21, %cst_9 {dimension_numbers = #tpu.dot_dimension_numbers<[2], [2], [1], [1], [0, 0, 0, 1, 1, 1], [0], [0]>} : vector<2x8x128xbf16>, vector<2x8x128xbf16>, vector<2x8x8xf32> -> vector<2x8x8xf32>
    "tpu.trace_stop"() : () -> ()
    %cst_10 = arith.constant dense<0xFF800000> : vector<2x8xf32>
    %25 = vector.multi_reduction <maximumf>, %24, %cst_10 [2] : vector<2x8x8xf32> to vector<2x8xf32>
    %26 = vector.shape_cast %25 : vector<2x8xf32> to vector<2x8x1xf32>
    %27 = vector.broadcast %26 : vector<2x8x1xf32> to vector<2x8x8xf32>
    %28 = arith.subf %24, %27 : vector<2x8x8xf32>
    %29 = math.exp %28 : vector<2x8x8xf32>
    %cst_11 = arith.constant dense<0.000000e+00> : vector<2x8xf32>
    %30 = vector.multi_reduction <add>, %29, %cst_11 [2] : vector<2x8x8xf32> to vector<2x8xf32>
    %31 = vector.shape_cast %30 : vector<2x8xf32> to vector<2x8x1xf32>
    %32 = tpu.reciprocal %31 {approx = true} : vector<2x8x1xf32> -> vector<2x8x1xf32>
    %33 = vector.broadcast %32 : vector<2x8x1xf32> to vector<2x8x8xf32>
    %34 = arith.mulf %29, %33 : vector<2x8x8xf32>
    %35 = arith.truncf %34 : vector<2x8x8xf32> to vector<2x8x8xbf16>
    "tpu.trace_start"() <{level = 10 : i32, message = "blm,bmd->bld"}> : () -> ()
    %cst_12 = arith.constant dense<0.000000e+00> : vector<2x8x128xf32>
    %36 = tpu.matmul %35, %23, %cst_12 {dimension_numbers = #tpu.dot_dimension_numbers<[2], [1], [1], [2], [0, 0, 0, 1, 1, 2], [0], [0]>} : vector<2x8x8xbf16>, vector<2x8x128xbf16>, vector<2x8x128xf32> -> vector<2x8x128xf32>
    "tpu.trace_stop"() : () -> ()
    %37 = vector.shape_cast %36 : vector<2x8x128xf32> to vector<16x128xf32>
    %38 = arith.truncf %37 : vector<16x128xf32> to vector<16x128xbf16>
    %c0_13 = arith.constant 0 : index
    %c0_14 = arith.constant 0 : index
    %39 = vector.load %arg3[%c0_13, %c0_14] : memref<128x128xbf16, #tpu.memory_space<vmem>>, vector<128x128xbf16>
    %cst_15 = arith.constant dense<0.000000e+00> : vector<16x128xf32>
    %40 = tpu.matmul %38, %39, %cst_15 {dimension_numbers = #tpu.dot_dimension_numbers<[1], [0], [0], [1], [0, 0, 1, 1], [], []>} : vector<16x128xbf16>, vector<128x128xbf16>, vector<16x128xf32> -> vector<16x128xf32>
    %41 = vector.broadcast %1 : vector<1x128xf32> to vector<16x128xf32>
    %42 = arith.addf %40, %41 : vector<16x128xf32>
    %43 = arith.extf %9 : vector<16x128xbf16> to vector<16x128xf32>
    %44 = arith.addf %43, %42 : vector<16x128xf32>
    %cst_16 = arith.constant dense<0.000000e+00> : vector<16xf32>
    %45 = vector.multi_reduction <add>, %44, %cst_16 [1] : vector<16x128xf32> to vector<16xf32>
    %46 = vector.shape_cast %45 : vector<16xf32> to vector<16x1xf32>
    %cst_17 = arith.constant 3.125000e-02 : f32
    %47 = vector.broadcast %cst_17 : f32 to vector<16x1xf32>
    %48 = arith.mulf %46, %47 : vector<16x1xf32>
    %49 = vector.broadcast %48 : vector<16x1xf32> to vector<16x128xf32>
    %50 = arith.subf %44, %49 : vector<16x128xf32>
    %51 = vector.broadcast %7 : vector<1x128xf32> to vector<16x128xf32>
    %52 = arith.mulf %50, %51 : vector<16x128xf32>
    %53 = arith.mulf %52, %52 : vector<16x128xf32>
    %cst_18 = arith.constant dense<0.000000e+00> : vector<16xf32>
    %54 = vector.multi_reduction <add>, %53, %cst_18 [1] : vector<16x128xf32> to vector<16xf32>
    %55 = vector.shape_cast %54 : vector<16xf32> to vector<16x1xf32>
    %cst_19 = arith.constant 3.125000e-02 : f32
    %56 = vector.broadcast %cst_19 : f32 to vector<16x1xf32>
    %57 = arith.mulf %55, %56 : vector<16x1xf32>
    %cst_20 = arith.constant 9.99999974E-6 : f32
    %58 = vector.broadcast %cst_20 : f32 to vector<16x1xf32>
    %59 = arith.addf %57, %58 : vector<16x1xf32>
    %60 = math.rsqrt %59 : vector<16x1xf32>
    %61 = vector.broadcast %60 : vector<16x1xf32> to vector<16x128xf32>
    %62 = arith.mulf %52, %61 : vector<16x128xf32>
    %63 = vector.broadcast %3 : vector<1x128xf32> to vector<16x128xf32>
    %64 = arith.mulf %62, %63 : vector<16x128xf32>
    %65 = vector.broadcast %4 : vector<1x128xf32> to vector<16x128xf32>
    %66 = arith.addf %64, %65 : vector<16x128xf32>
    %67 = arith.truncf %66 : vector<16x128xf32> to vector<16x128xbf16>
    %c0_21 = arith.constant 0 : index
    %c0_22 = arith.constant 0 : index
    %68 = vector.load %arg4[%c0_21, %c0_22] : memref<128x128xbf16, #tpu.memory_space<vmem>>, vector<128x128xbf16>
    %cst_23 = arith.constant dense<0.000000e+00> : vector<16x128xf32>
    %69 = tpu.matmul %67, %68, %cst_23 {dimension_numbers = #tpu.dot_dimension_numbers<[1], [0], [0], [1], [0, 0, 1, 1], [], []>} : vector<16x128xbf16>, vector<128x128xbf16>, vector<16x128xf32> -> vector<16x128xf32>
    %c0_24 = arith.constant 0 : index
    %c0_25 = arith.constant 0 : index
    %70 = vector.load %arg7[%c0_24, %c0_25] : memref<1x128xf32, #tpu.memory_space<vmem>>, vector<1x128xf32>
    %71 = vector.broadcast %70 : vector<1x128xf32> to vector<16x128xf32>
    %72 = arith.addf %69, %71 : vector<16x128xf32>
    %cst_26 = arith.constant 0.000000e+00 : f32
    %73 = vector.broadcast %cst_26 : f32 to vector<16x128xf32>
    %74 = arith.maximumf %72, %73 : vector<16x128xf32>
    %75 = arith.truncf %74 : vector<16x128xf32> to vector<16x128xbf16>
    %c0_27 = arith.constant 0 : index
    %c0_28 = arith.constant 0 : index
    %76 = vector.load %arg5[%c0_27, %c0_28] : memref<128x128xbf16, #tpu.memory_space<vmem>>, vector<128x128xbf16>
    %cst_29 = arith.constant dense<0.000000e+00> : vector<16x128xf32>
    %77 = tpu.matmul %75, %76, %cst_29 {dimension_numbers = #tpu.dot_dimension_numbers<[1], [0], [0], [1], [0, 0, 1, 1], [], []>} : vector<16x128xbf16>, vector<128x128xbf16>, vector<16x128xf32> -> vector<16x128xf32>
    %78 = vector.broadcast %2 : vector<1x128xf32> to vector<16x128xf32>
    %79 = arith.addf %77, %78 : vector<16x128xf32>
    %80 = arith.addf %66, %79 : vector<16x128xf32>
    %cst_30 = arith.constant dense<0.000000e+00> : vector<16xf32>
    %81 = vector.multi_reduction <add>, %80, %cst_30 [1] : vector<16x128xf32> to vector<16xf32>
    %82 = vector.shape_cast %81 : vector<16xf32> to vector<16x1xf32>
    %cst_31 = arith.constant 3.125000e-02 : f32
    %83 = vector.broadcast %cst_31 : f32 to vector<16x1xf32>
    %84 = arith.mulf %82, %83 : vector<16x1xf32>
    %85 = vector.broadcast %84 : vector<16x1xf32> to vector<16x128xf32>
    %86 = arith.subf %80, %85 : vector<16x128xf32>
    %87 = vector.broadcast %7 : vector<1x128xf32> to vector<16x128xf32>
    %88 = arith.mulf %86, %87 : vector<16x128xf32>
    %89 = arith.mulf %88, %88 : vector<16x128xf32>
    %cst_32 = arith.constant dense<0.000000e+00> : vector<16xf32>
    %90 = vector.multi_reduction <add>, %89, %cst_32 [1] : vector<16x128xf32> to vector<16xf32>
    %91 = vector.shape_cast %90 : vector<16xf32> to vector<16x1xf32>
    %cst_33 = arith.constant 3.125000e-02 : f32
    %92 = vector.broadcast %cst_33 : f32 to vector<16x1xf32>
    %93 = arith.mulf %91, %92 : vector<16x1xf32>
    %cst_34 = arith.constant 9.99999974E-6 : f32
    %94 = vector.broadcast %cst_34 : f32 to vector<16x1xf32>
    %95 = arith.addf %93, %94 : vector<16x1xf32>
    %96 = math.rsqrt %95 : vector<16x1xf32>
    %97 = vector.broadcast %96 : vector<16x1xf32> to vector<16x128xf32>
    %98 = arith.mulf %88, %97 : vector<16x128xf32>
    %99 = vector.broadcast %5 : vector<1x128xf32> to vector<16x128xf32>
    %100 = arith.mulf %98, %99 : vector<16x128xf32>
    %101 = vector.broadcast %6 : vector<1x128xf32> to vector<16x128xf32>
    %102 = arith.addf %100, %101 : vector<16x128xf32>
    %103 = vector.shape_cast %102 : vector<16x128xf32> to vector<2x8x128xf32>
    %c0_35 = arith.constant 0 : index
    %c0_36 = arith.constant 0 : index
    %c0_37 = arith.constant 0 : index
    %104 = vector.load %arg9[%c0_35, %c0_36, %c0_37] : memref<2x8x128xf32, #tpu.memory_space<vmem>>, vector<2x8x128xf32>
    tpu.vector_store %arg9[%c0_35, %c0_36, %c0_37], %103 {strides = array<i32>} : memref<2x8x128xf32, #tpu.memory_space<vmem>>, vector<2x8x128xf32>,
    return
  }
  func.func @transform_0(%arg0: i32) -> (i32, i32, i32) {
    %c0_i32 = arith.constant 0 : i32
    %c0_i32_0 = arith.constant 0 : i32
    %c0_i32_1 = arith.constant 0 : i32
    return %arg0, %c0_i32, %c0_i32_0 : i32, i32, i32
  }
  func.func @transform_1(%arg0: i32) -> (i32, i32) {
    %c0_i32 = arith.constant 0 : i32
    %c0_i32_0 = arith.constant 0 : i32
    %c0_i32_1 = arith.constant 0 : i32
    return %c0_i32, %c0_i32_0 : i32, i32
  }
  func.func @transform_2(%arg0: i32) -> (i32, i32) {
    %c0_i32 = arith.constant 0 : i32
    %c0_i32_0 = arith.constant 0 : i32
    %c0_i32_1 = arith.constant 0 : i32
    return %c0_i32, %c0_i32_0 : i32, i32
  }
  func.func @transform_3(%arg0: i32) -> (i32, i32) {
    %c0_i32 = arith.constant 0 : i32
    %c0_i32_0 = arith.constant 0 : i32
    %c0_i32_1 = arith.constant 0 : i32
    return %c0_i32, %c0_i32_0 : i32, i32
  }
  func.func @transform_4(%arg0: i32) -> (i32, i32) {
    %c0_i32 = arith.constant 0 : i32
    %c0_i32_0 = arith.constant 0 : i32
    %c0_i32_1 = arith.constant 0 : i32
    return %c0_i32, %c0_i32_0 : i32, i32
  }
  func.func @transform_5(%arg0: i32) -> (i32, i32) {
    %c0_i32 = arith.constant 0 : i32
    %c0_i32_0 = arith.constant 0 : i32
    %c0_i32_1 = arith.constant 0 : i32
    return %c0_i32, %c0_i32_0 : i32, i32
  }
  func.func @transform_6(%arg0: i32) -> (i32, i32) {
    %c0_i32 = arith.constant 0 : i32
    %c0_i32_0 = arith.constant 0 : i32
    %c0_i32_1 = arith.constant 0 : i32
    return %c0_i32, %c0_i32_0 : i32, i32
  }
  func.func @transform_7(%arg0: i32) -> (i32, i32) {
    %c0_i32 = arith.constant 0 : i32
    %c0_i32_0 = arith.constant 0 : i32
    %c0_i32_1 = arith.constant 0 : i32
    return %c0_i32, %c0_i32_0 : i32, i32
  }
  func.func @transform_8(%arg0: i32) -> (i32, i32, i32) {
    %c0_i32 = arith.constant 0 : i32
    %c0_i32_0 = arith.constant 0 : i32
    %c0_i32_1 = arith.constant 0 : i32
    return %arg0, %c0_i32, %c0_i32_0 : i32, i32, i32
  }
}

module attributes {stable_mosaic.version = 11 : i64} {
  func.func @_encoder_layer_kernel(%arg0: i32, %arg1: memref<2x8x128xbf16, #tpu.memory_space<vmem>>, %arg2: memref<128x384xbf16, #tpu.memory_space<vmem>>, %arg3: memref<128x128xbf16, #tpu.memory_space<vmem>>, %arg4: memref<128x128xbf16, #tpu.memory_space<vmem>>, %arg5: memref<128x128xbf16, #tpu.memory_space<vmem>>, %arg6: memref<1x384xf32, #tpu.memory_space<vmem>>, %arg7: memref<1x128xf32, #tpu.memory_space<vmem>>, %arg8: memref<8x128xf32, #tpu.memory_space<vmem>>, %arg9: memref<2x8x128xf32, #tpu.memory_space<vmem>>) attributes {dimension_semantics = [#tpu.dimension_semantics<parallel>], iteration_bounds = array<i64: 1>, scalar_prefetch = 0 : i64, scratch_operands = 0 : i64, tpu.core_type = #tpu.core_type<tc>, window_params = [{transform_indices = @transform_0, window_bounds = array<i64: 2, 8, 128>}, {pipeline_mode = #tpu.pipeline_mode<synchronous>, transform_indices = @transform_1, window_bounds = array<i64: 128, 384>}, {pipeline_mode = #tpu.pipeline_mode<synchronous>, transform_indices = @transform_2, window_bounds = array<i64: 128, 128>}, {pipeline_mode = #tpu.pipeline_mode<synchronous>, transform_indices = @transform_3, window_bounds = array<i64: 128, 128>}, {pipeline_mode = #tpu.pipeline_mode<synchronous>, transform_indices = @transform_4, window_bounds = array<i64: 128, 128>}, {pipeline_mode = #tpu.pipeline_mode<synchronous>, transform_indices = @transform_5, window_bounds = array<i64: 1, 384>}, {pipeline_mode = #tpu.pipeline_mode<synchronous>, transform_indices = @transform_6, window_bounds = array<i64: 1, 128>}, {pipeline_mode = #tpu.pipeline_mode<synchronous>, transform_indices = @transform_7, window_bounds = array<i64: 8, 128>}, {transform_indices = @transform_8, window_bounds = array<i64: 2, 8, 128>}]} {
    %c0 = arith.constant 0 : index
    %c0_0 = arith.constant 0 : index
    %0 = vector.load %arg8[%c0, %c0_0] : memref<8x128xf32, #tpu.memory_space<vmem>>, vector<8x128xf32>
    %1 = vector.extract_strided_slice %0 {offsets = [0, 0], sizes = [1, 128], strides = [1, 1]} : vector<8x128xf32> to vector<1x128xf32>
    %2 = vector.extract_strided_slice %0 {offsets = [1, 0], sizes = [1, 128], strides = [1, 1]} : vector<8x128xf32> to vector<1x128xf32>
    %3 = vector.extract_strided_slice %0 {offsets = [2, 0], sizes = [1, 128], strides = [1, 1]} : vector<8x128xf32> to vector<1x128xf32>
    %4 = vector.extract_strided_slice %0 {offsets = [3, 0], sizes = [1, 128], strides = [1, 1]} : vector<8x128xf32> to vector<1x128xf32>
    %5 = vector.extract_strided_slice %0 {offsets = [4, 0], sizes = [1, 128], strides = [1, 1]} : vector<8x128xf32> to vector<1x128xf32>
    %6 = vector.extract_strided_slice %0 {offsets = [5, 0], sizes = [1, 128], strides = [1, 1]} : vector<8x128xf32> to vector<1x128xf32>
    %7 = vector.extract_strided_slice %0 {offsets = [6, 0], sizes = [1, 128], strides = [1, 1]} : vector<8x128xf32> to vector<1x128xf32>
    %c0_1 = arith.constant 0 : index
    %c0_2 = arith.constant 0 : index
    %c0_3 = arith.constant 0 : index
    %8 = vector.load %arg1[%c0_1, %c0_2, %c0_3] : memref<2x8x128xbf16, #tpu.memory_space<vmem>>, vector<2x8x128xbf16>
    %9 = vector.shape_cast %8 : vector<2x8x128xbf16> to vector<16x128xbf16>
    %c0_4 = arith.constant 0 : index
    %c0_5 = arith.constant 0 : index
    %10 = vector.load %arg2[%c0_4, %c0_5] : memref<128x384xbf16, #tpu.memory_space<vmem>>, vector<128x384xbf16>
    %cst = arith.constant dense<0.000000e+00> : vector<16x384xf32>
    %11 = tpu.matmul %9, %10, %cst {dimension_numbers = #tpu.dot_dimension_numbers<[1], [0], [0], [1], [0, 0, 1, 1], [], []>} : vector<16x128xbf16>, vector<128x384xbf16>, vector<16x384xf32> -> vector<16x384xf32>
    %c0_6 = arith.constant 0 : index
    %c0_7 = arith.constant 0 : index
    %12 = vector.load %arg6[%c0_6, %c0_7] : memref<1x384xf32, #tpu.memory_space<vmem>>, vector<1x384xf32>
    %13 = vector.broadcast %12 : vector<1x384xf32> to vector<16x384xf32>
    %14 = arith.addf %11, %13 : vector<16x384xf32>
    %15 = vector.shape_cast %14 : vector<16x384xf32> to vector<2x8x384xf32>
    %16 = vector.extract_strided_slice %15 {offsets = [0, 0, 0], sizes = [2, 8, 128], strides = [1, 1, 1]} : vector<2x8x384xf32> to vector<2x8x128xf32>
    %cst_8 = arith.constant 0.176776692 : f32
    %17 = vector.broadcast %cst_8 : f32 to vector<2x8x128xf32>
    %18 = arith.mulf %16, %17 : vector<2x8x128xf32>
    %19 = arith.truncf %18 : vector<2x8x128xf32> to vector<2x8x128xbf16>
    %20 = vector.extract_strided_slice %15 {offsets = [0, 0, 128], sizes = [2, 8, 128], strides = [1, 1, 1]} : vector<2x8x384xf32> to vector<2x8x128xf32>
    %21 = arith.truncf %20 : vector<2x8x128xf32> to vector<2x8x128xbf16>
    %22 = vector.extract_strided_slice %15 {offsets = [0, 0, 256], sizes = [2, 8, 128], strides = [1, 1, 1]} : vector<2x8x384xf32> to vector<2x8x128xf32>
    %23 = arith.truncf %22 : vector<2x8x128xf32> to vector<2x8x128xbf16>
    "tpu.trace_start"() <{level = 10 : i32, message = "bld,bmd->blm"}> : () -> ()
    %cst_9 = arith.constant dense<0.000000e+00> : vector<2x8x8xf32>
    %24 = tpu.matmul %19, %21, %cst_9 {dimension_numbers = #tpu.dot_dimension_numbers<[2], [2], [1], [1], [0, 0, 0, 1, 1, 1], [0], [0]>} : vector<2x8x128xbf16>, vector<2x8x128xbf16>, vector<2x8x8xf32> -> vector<2x8x8xf32>
    "tpu.trace_stop"() : () -> ()
    %cst_10 = arith.constant dense<0xFF800000> : vector<2x8xf32>
    %25 = vector.multi_reduction <maximumf>, %24, %cst_10 [2] : vector<2x8x8xf32> to vector<2x8xf32>
    %26 = vector.shape_cast %25 : vector<2x8xf32> to vector<2x8x1xf32>
    %27 = vector.broadcast %26 : vector<2x8x1xf32> to vector<2x8x8xf32>
    %28 = arith.subf %24, %27 : vector<2x8x8xf32>
    %29 = math.exp %28 : vector<2x8x8xf32>
    %cst_11 = arith.constant dense<0.000000e+00> : vector<2x8xf32>
    %30 = vector.multi_reduction <add>, %29, %cst_11 [2] : vector<2x8x8xf32> to vector<2x8xf32>
    %31 = vector.shape_cast %30 : vector<2x8xf32> to vector<2x8x1xf32>
    %32 = tpu.reciprocal %31 {approx = true} : vector<2x8x1xf32> -> vector<2x8x1xf32>
    %33 = vector.broadcast %32 : vector<2x8x1xf32> to vector<2x8x8xf32>
    %34 = arith.mulf %29, %33 : vector<2x8x8xf32>
    %35 = arith.truncf %34 : vector<2x8x8xf32> to vector<2x8x8xbf16>
    "tpu.trace_start"() <{level = 10 : i32, message = "blm,bmd->bld"}> : () -> ()
    %cst_12 = arith.constant dense<0.000000e+00> : vector<2x8x128xf32>
    %36 = tpu.matmul %35, %23, %cst_12 {dimension_numbers = #tpu.dot_dimension_numbers<[2], [1], [1], [2], [0, 0, 0, 1, 1, 2], [0], [0]>} : vector<2x8x8xbf16>, vector<2x8x128xbf16>, vector<2x8x128xf32> -> vector<2x8x128xf32>
    "tpu.trace_stop"() : () -> ()
    %37 = vector.shape_cast %36 : vector<2x8x128xf32> to vector<16x128xf32>
    %38 = arith.truncf %37 : vector<16x128xf32> to vector<16x128xbf16>
    %c0_13 = arith.constant 0 : index
    %c0_14 = arith.constant 0 : index
    %39 = vector.load %arg3[%c0_13, %c0_14] : memref<128x128xbf16, #tpu.memory_space<vmem>>, vector<128x128xbf16>
    %cst_15 = arith.constant dense<0.000000e+00> : vector<16x128xf32>
    %40 = tpu.matmul %38, %39, %cst_15 {dimension_numbers = #tpu.dot_dimension_numbers<[1], [0], [0], [1], [0, 0, 1, 1], [], []>} : vector<16x128xbf16>, vector<128x128xbf16>, vector<16x128xf32> -> vector<16x128xf32>
    %41 = vector.broadcast %1 : vector<1x128xf32> to vector<16x128xf32>
    %42 = arith.addf %40, %41 : vector<16x128xf32>
    %43 = arith.extf %9 : vector<16x128xbf16> to vector<16x128xf32>
    %44 = arith.addf %43, %42 : vector<16x128xf32>
    %cst_16 = arith.constant dense<0.000000e+00> : vector<16xf32>
    %45 = vector.multi_reduction <add>, %44, %cst_16 [1] : vector<16x128xf32> to vector<16xf32>
    %46 = vector.shape_cast %45 : vector<16xf32> to vector<16x1xf32>
    %cst_17 = arith.constant 3.125000e-02 : f32
    %47 = vector.broadcast %cst_17 : f32 to vector<16x1xf32>
    %48 = arith.mulf %46, %47 : vector<16x1xf32>
    %49 = vector.broadcast %48 : vector<16x1xf32> to vector<16x128xf32>
    %50 = arith.subf %44, %49 : vector<16x128xf32>
    %51 = vector.broadcast %7 : vector<1x128xf32> to vector<16x128xf32>
    %52 = arith.mulf %50, %51 : vector<16x128xf32>
    %53 = arith.mulf %52, %52 : vector<16x128xf32>
    %cst_18 = arith.constant dense<0.000000e+00> : vector<16xf32>
    %54 = vector.multi_reduction <add>, %53, %cst_18 [1] : vector<16x128xf32> to vector<16xf32>
    %55 = vector.shape_cast %54 : vector<16xf32> to vector<16x1xf32>
    %cst_19 = arith.constant 3.125000e-02 : f32
    %56 = vector.broadcast %cst_19 : f32 to vector<16x1xf32>
    %57 = arith.mulf %55, %56 : vector<16x1xf32>
    %cst_20 = arith.constant 9.99999974E-6 : f32
    %58 = vector.broadcast %cst_20 : f32 to vector<16x1xf32>
    %59 = arith.addf %57, %58 : vector<16x1xf32>
    %60 = math.rsqrt %59 : vector<16x1xf32>
    %61 = vector.broadcast %60 : vector<16x1xf32> to vector<16x128xf32>
    %62 = arith.mulf %52, %61 : vector<16x128xf32>
    %63 = vector.broadcast %3 : vector<1x128xf32> to vector<16x128xf32>
    %64 = arith.mulf %62, %63 : vector<16x128xf32>
    %65 = vector.broadcast %4 : vector<1x128xf32> to vector<16x128xf32>
    %66 = arith.addf %64, %65 : vector<16x128xf32>
    %67 = arith.truncf %66 : vector<16x128xf32> to vector<16x128xbf16>
    %c0_21 = arith.constant 0 : index
    %c0_22 = arith.constant 0 : index
    %68 = vector.load %arg4[%c0_21, %c0_22] : memref<128x128xbf16, #tpu.memory_space<vmem>>, vector<128x128xbf16>
    %cst_23 = arith.constant dense<0.000000e+00> : vector<16x128xf32>
    %69 = tpu.matmul %67, %68, %cst_23 {dimension_numbers = #tpu.dot_dimension_numbers<[1], [0], [0], [1], [0, 0, 1, 1], [], []>} : vector<16x128xbf16>, vector<128x128xbf16>, vector<16x128xf32> -> vector<16x128xf32>
    %c0_24 = arith.constant 0 : index
    %c0_25 = arith.constant 0 : index
    %70 = vector.load %arg7[%c0_24, %c0_25] : memref<1x128xf32, #tpu.memory_space<vmem>>, vector<1x128xf32>
    %71 = vector.broadcast %70 : vector<1x128xf32> to vector<16x128xf32>
    %72 = arith.addf %69, %71 : vector<16x128xf32>
    %cst_26 = arith.constant 0.000000e+00 : f32
    %73 = vector.broadcast %cst_26 : f32 to vector<16x128xf32>
    %74 = arith.maximumf %72, %73 : vector<16x128xf32>
    %75 = arith.truncf %74 : vector<16x128xf32> to vector<16x128xbf16>
    %c0_27 = arith.constant 0 : index
    %c0_28 = arith.constant 0 : index
    %76 = vector.load %arg5[%c0_27, %c0_28] : memref<128x128xbf16, #tpu.memory_space<vmem>>, vector<128x128xbf16>
    %cst_29 = arith.constant dense<0.000000e+00> : vector<16x128xf32>
    %77 = tpu.matmul %75, %76, %cst_29 {dimension_numbers = #tpu.dot_dimension_numbers<[1], [0], [0], [1], [0, 0, 1, 1], [], []>} : vector<16x128xbf16>, vector<128x128xbf16>, vector<16x128xf32> -> vector<16x128xf32>
    %78 = vector.broadcast %2 : vector<1x128xf32> to vector<16x128xf32>
    %79 = arith.addf %77, %78 : vector<16x128xf32>
    %80 = arith.addf %66, %79 : vector<16x128xf32>
    %cst_30 = arith.constant dense<0.000000e+00> : vector<16xf32>
    %81 = vector.multi_reduction <add>, %80, %cst_30 [1] : vector<16x128xf32> to vector<16xf32>
    %82 = vector.shape_cast %81 : vector<16xf32> to vector<16x1xf32>
    %cst_31 = arith.constant 3.125000e-02 : f32
    %83 = vector.broadcast %cst_31 : f32 to vector<16x1xf32>
    %84 = arith.mulf %82, %83 : vector<16x1xf32>
    %85 = vector.broadcast %84 : vector<16x1xf32> to vector<16x128xf32>
    %86 = arith.subf %80, %85 : vector<16x128xf32>
    %87 = vector.broadcast %7 : vector<1x128xf32> to vector<16x128xf32>
    %88 = arith.mulf %86, %87 : vector<16x128xf32>
    %89 = arith.mulf %88, %88 : vector<16x128xf32>
    %cst_32 = arith.constant dense<0.000000e+00> : vector<16xf32>
    %90 = vector.multi_reduction <add>, %89, %cst_32 [1] : vector<16x128xf32> to vector<16xf32>
    %91 = vector.shape_cast %90 : vector<16xf32> to vector<16x1xf32>
    %cst_33 = arith.constant 3.125000e-02 : f32
    %92 = vector.broadcast %cst_33 : f32 to vector<16x1xf32>
    %93 = arith.mulf %91, %92 : vector<16x1xf32>
    %cst_34 = arith.constant 9.99999974E-6 : f32
    %94 = vector.broadcast %cst_34 : f32 to vector<16x1xf32>
    %95 = arith.addf %93, %94 : vector<16x1xf32>
    %96 = math.rsqrt %95 : vector<16x1xf32>
    %97 = vector.broadcast %96 : vector<16x1xf32> to vector<16x128xf32>
    %98 = arith.mulf %88, %97 : vector<16x128xf32>
    %99 = vector.broadcast %5 : vector<1x128xf32> to vector<16x128xf32>
    %100 = arith.mulf %98, %99 : vector<16x128xf32>
    %101 = vector.broadcast %6 : vector<1x128xf32> to vector<16x128xf32>
    %102 = arith.addf %100, %101 : vector<16x128xf32>
    %103 = vector.shape_cast %102 : vector<16x128xf32> to vector<2x8x128xf32>
    %c0_35 = arith.constant 0 : index
    %c0_36 = arith.constant 0 : index
    %c0_37 = arith.constant 0 : index
    %104 = vector.load %arg9[%c0_35, %c0_36, %c0_37] : memref<2x8x128xf32, #tpu.memory_space<vmem>>, vector<2x8x128xf32>
    tpu.vector_store %arg9[%c0_35, %c0_36, %c0_37], %103 {strides = array<i32>} : memref<2x8x128xf32, #tpu.memory_space<vmem>>, vector<2x8x128xf32>,
    return
  }
  func.func @transform_0(%arg0: i32) -> (i32, i32, i32) {
    %c0_i32 = arith.constant 0 : i32
    %c0_i32_0 = arith.constant 0 : i32
    %c0_i32_1 = arith.constant 0 : i32
    return %arg0, %c0_i32, %c0_i32_0 : i32, i32, i32
  }
  func.func @transform_1(%arg0: i32) -> (i32, i32) {
    %c0_i32 = arith.constant 0 : i32
    %c0_i32_0 = arith.constant 0 : i32
    %c0_i32_1 = arith.constant 0 : i32
    return %c0_i32, %c0_i32_0 : i32, i32
  }
  func.func @transform_2(%arg0: i32) -> (i32, i32) {
    %c0_i32 = arith.constant 0 : i32
    %c0_i32_0 = arith.constant 0 : i32
    %c0_i32_1 = arith.constant 0 : i32
    return %c0_i32, %c0_i32_0 : i32, i32
  }
  func.func @transform_3(%arg0: i32) -> (i32, i32) {
    %c0_i32 = arith.constant 0 : i32
    %c0_i32_0 = arith.constant 0 : i32
    %c0_i32_1 = arith.constant 0 : i32
    return %c0_i32, %c0_i32_0 : i32, i32
  }
  func.func @transform_4(%arg0: i32) -> (i32, i32) {
    %c0_i32 = arith.constant 0 : i32
    %c0_i32_0 = arith.constant 0 : i32
    %c0_i32_1 = arith.constant 0 : i32
    return %c0_i32, %c0_i32_0 : i32, i32
  }
  func.func @transform_5(%arg0: i32) -> (i32, i32) {
    %c0_i32 = arith.constant 0 : i32
    %c0_i32_0 = arith.constant 0 : i32
    %c0_i32_1 = arith.constant 0 : i32
    return %c0_i32, %c0_i32_0 : i32, i32
  }
  func.func @transform_6(%arg0: i32) -> (i32, i32) {
    %c0_i32 = arith.constant 0 : i32
    %c0_i32_0 = arith.constant 0 : i32
    %c0_i32_1 = arith.constant 0 : i32
    return %c0_i32, %c0_i32_0 : i32, i32
  }
  func.func @transform_7(%arg0: i32) -> (i32, i32) {
    %c0_i32 = arith.constant 0 : i32
    %c0_i32_0 = arith.constant 0 : i32
    %c0_i32_1 = arith.constant 0 : i32
    return %c0_i32, %c0_i32_0 : i32, i32
  }
  func.func @transform_8(%arg0: i32) -> (i32, i32, i32) {
    %c0_i32 = arith.constant 0 : i32
    %c0_i32_0 = arith.constant 0 : i32
    %c0_i32_1 = arith.constant 0 : i32
    return %arg0, %c0_i32, %c0_i32_0 : i32, i32, i32
  }
}

</mosaic_0001>

<llo_original>
// kernel: tpu_custom_call.1
$region0: #{tpu_custom_call.1}
  #allocation0 [shape = 'u32[]', space=smem, size = 0x4, offset = 0x4, fixed_abs, tag = 'smem constant byte address 0x4 - core index']
  #allocation1 [shape = 'u32[72,128]{1,0:T(1,128)}', space=vmem, size = 0x9000, scoped, tag = 'internal scratch']
  %s0 = inlined_call_operand.hbm [shape: bf16[2,8,128], index: 0, kind: input, shape index: {}]
  %s1 = inlined_call_operand.hbm [shape: bf16[128,384], index: 1, kind: input, shape index: {}]
  %s2 = inlined_call_operand.hbm [shape: bf16[128,128], index: 2, kind: input, shape index: {}]
  %s3 = inlined_call_operand.hbm [shape: bf16[128,128], index: 3, kind: input, shape index: {}]
  %s4 = inlined_call_operand.hbm [shape: bf16[128,128], index: 4, kind: input, shape index: {}]
  %s5 = inlined_call_operand.vmem [shape: f32[1,384], index: 5, kind: input, shape index: {}]
  %s6 = inlined_call_operand.vmem [shape: f32[1,128], index: 6, kind: input, shape index: {}]
  %s7 = inlined_call_operand.hbm [shape: f32[8,128], index: 7, kind: input, shape index: {}]
  %s8 = inlined_call_operand.hbm [shape: f32[2,8,128], index: 8, kind: output, shape index: {}]
  %s9 = sld [smem:[#allocation0]]
  $region66: #{tpu_custom_call.1} parent=0
    _
  %s11 = ssub.s32 1, %s9
  %s12 = scalar_select 0, %s11, %s9
  $region1: #{tpu_custom_call.1} parent=0
    #allocation2 [shape = 'u8[4096]{0}', space=vmem, size = 0x1000, scoped, tag = 'input window, operand 0, single buffered']
    #allocation3 [shape = 's32[1]{0}', space=sflag, size = 0x4, scoped, tag = 'scoped memory for tpu_custom_call.1']
    #allocation4 [shape = 's32[1]{0}', space=sflag, size = 0x4, scoped, tag = 'scoped memory for tpu_custom_call.1']
    #allocation5 [shape = 'u8[98304]{0}', space=vmem, size = 0x18000, scoped, tag = 'input window, operand 1, single buffered']
    #allocation6 [shape = 's32[1]{0}', space=sflag, size = 0x4, scoped, tag = 'scoped memory for tpu_custom_call.1']
    #allocation7 [shape = 'u8[32768]{0}', space=vmem, size = 0x8000, scoped, tag = 'input window, operand 2, single buffered']
    #allocation8 [shape = 'u8[32768]{0}', space=vmem, size = 0x8000, scoped, tag = 'input window, operand 3, single buffered']
    #allocation9 [shape = 's32[1]{0}', space=sflag, size = 0x4, scoped, tag = 'scoped memory for tpu_custom_call.1']
    #allocation10 [shape = 'u8[32768]{0}', space=vmem, size = 0x8000, scoped, tag = 'input window, operand 4, single buffered']
    #allocation11 [shape = 'u8[4096]{0}', space=vmem, size = 0x1000, scoped, tag = 'input window, operand 7, single buffered']
    #allocation12 [shape = 's32[1]{0}', space=sflag, size = 0x4, scoped, tag = 'scoped memory for tpu_custom_call.1']
    #allocation13 [shape = 'u8[8192]{0}', space=vmem, size = 0x2000, scoped, tag = 'output window, operand 0, single buffered']
    %13 = vsyncpa [#allocation3], 0
    %14 = vsyncpa [#allocation6], 0
    %15 = vsyncpa [#allocation9], 0
    %16 = vsyncpa [#allocation12], 0
    %17 = vsyncpa [#allocation4], 0
    // Predicated region
    $region2: #{tpu_custom_call.1} parent=1 // pred_check
      _
    $region3: #{tpu_custom_call.1} parent=1 // pred_check_branch
      %19 = sbr.rel (0) target = $region5
    $region4: #{tpu_custom_call.1} parent=1 // pred_region
      %21 = vsyncadd [#allocation3], 0
      %s22 = sshll.u32 %s0, 4
      %s23 = int_to_ptr.hbm [resolvable:$true] %s22
      %s24 = sshll.u32 [#allocation2], 4
      %s25 = int_to_ptr.vmem [resolvable:$true] %s24
      %30 = dma.hbm_to_vmem [thread:$0]  %s23, 128, %s25, [#allocation3], 64, 64, 4
    $region5: #{tpu_custom_call.1} parent=1 // pred_fallthru
      _
    // Predicated region
    $region6: #{tpu_custom_call.1} parent=1 // pred_check
      _
    $region7: #{tpu_custom_call.1} parent=1 // pred_check_branch
      %32 = sbr.rel (0) target = $region9
    $region8: #{tpu_custom_call.1} parent=1 // pred_region
      %34 = vsyncadd [#allocation6], 0
      %s35 = sshll.u32 %s1, 4
      %s36 = int_to_ptr.hbm [resolvable:$true] %s35
      %s37 = sshll.u32 [#allocation5], 4
      %s38 = int_to_ptr.vmem [resolvable:$true] %s37
      %43 = dma.hbm_to_vmem [thread:$0]  %s36, 3072, %s38, [#allocation6], 192, 192, 12
    $region9: #{tpu_custom_call.1} parent=1 // pred_fallthru
      _
    // Predicated region
    $region10: #{tpu_custom_call.1} parent=1 // pred_check
      _
    $region11: #{tpu_custom_call.1} parent=1 // pred_check_branch
      %45 = sbr.rel (0) target = $region13
    $region12: #{tpu_custom_call.1} parent=1 // pred_region
      %47 = vsyncadd [#allocation6], 0
      %s48 = sshll.u32 %s2, 4
      %s49 = int_to_ptr.hbm [resolvable:$true] %s48
      %s50 = sshll.u32 [#allocation7], 4
      %s51 = int_to_ptr.vmem [resolvable:$true] %s50
      %56 = dma.hbm_to_vmem [thread:$0]  %s49, 1024, %s51, [#allocation6], 64, 64, 4
    $region13: #{tpu_custom_call.1} parent=1 // pred_fallthru
      _
    // Predicated region
    $region14: #{tpu_custom_call.1} parent=1 // pred_check
      _
    $region15: #{tpu_custom_call.1} parent=1 // pred_check_branch
      %58 = sbr.rel (0) target = $region17
    $region16: #{tpu_custom_call.1} parent=1 // pred_region
      %60 = vsyncadd [#allocation9], 0
      %s61 = sshll.u32 %s3, 4
      %s62 = int_to_ptr.hbm [resolvable:$true] %s61
      %s63 = sshll.u32 [#allocation8], 4
      %s64 = int_to_ptr.vmem [resolvable:$true] %s63
      %69 = dma.hbm_to_vmem [thread:$0]  %s62, 1024, %s64, [#allocation9], 64, 64, 4
    $region17: #{tpu_custom_call.1} parent=1 // pred_fallthru
      _
    // Predicated region
    $region18: #{tpu_custom_call.1} parent=1 // pred_check
      _
    $region19: #{tpu_custom_call.1} parent=1 // pred_check_branch
      %71 = sbr.rel (0) target = $region21
    $region20: #{tpu_custom_call.1} parent=1 // pred_region
      %73 = vsyncadd [#allocation9], 0
      %s74 = sshll.u32 %s4, 4
      %s75 = int_to_ptr.hbm [resolvable:$true] %s74
      %s76 = sshll.u32 [#allocation10], 4
      %s77 = int_to_ptr.vmem [resolvable:$true] %s76
      %82 = dma.hbm_to_vmem [thread:$0]  %s75, 1024, %s77, [#allocation9], 64, 64, 4
    $region21: #{tpu_custom_call.1} parent=1 // pred_fallthru
      _
    // Predicated region
    $region22: #{tpu_custom_call.1} parent=1 // pred_check
      _
    $region23: #{tpu_custom_call.1} parent=1 // pred_check_branch
      %84 = sbr.rel (0) target = $region25
    $region24: #{tpu_custom_call.1} parent=1 // pred_region
      _
    $region25: #{tpu_custom_call.1} parent=1 // pred_fallthru
      _
    // Predicated region
    $region26: #{tpu_custom_call.1} parent=1 // pred_check
      _
    $region27: #{tpu_custom_call.1} parent=1 // pred_check_branch
      %86 = sbr.rel (0) target = $region29
    $region28: #{tpu_custom_call.1} parent=1 // pred_region
      _
    $region29: #{tpu_custom_call.1} parent=1 // pred_fallthru
      _
    // Predicated region
    $region30: #{tpu_custom_call.1} parent=1 // pred_check
      _
    $region31: #{tpu_custom_call.1} parent=1 // pred_check_branch
      %88 = sbr.rel (0) target = $region33
    $region32: #{tpu_custom_call.1} parent=1 // pred_region
      %90 = vsyncadd [#allocation12], 0
      %s92 = sshll.u32 %s7, 4
      %s93 = int_to_ptr.hbm [resolvable:$true] %s92
      %s94 = sshll.u32 [#allocation11], 4
      %s95 = int_to_ptr.vmem [resolvable:$true] %s94
      %97 = dma.hbm_to_vmem [thread:$0]  %s93, 128, %s95, [#allocation12]
    $region33: #{tpu_custom_call.1} parent=1 // pred_fallthru
      _
    // Predicated region
    $region34: #{tpu_custom_call.1} parent=1 // pred_check
      _
    $region35: #{tpu_custom_call.1} parent=1 // pred_check_branch
      %99 = sbr.rel (0) target = $region37
    $region36: #{tpu_custom_call.1} parent=1 // pred_region
      %101 = dma.done [#allocation3], 128
    $region37: #{tpu_custom_call.1} parent=1 // pred_fallthru
      _
    // Predicated region
    $region38: #{tpu_custom_call.1} parent=1 // pred_check
      _
    $region39: #{tpu_custom_call.1} parent=1 // pred_check_branch
      %103 = sbr.rel (0) target = $region41
    $region40: #{tpu_custom_call.1} parent=1 // pred_region
      %105 = dma.done [#allocation6], 3072
    $region41: #{tpu_custom_call.1} parent=1 // pred_fallthru
      _
    // Predicated region
    $region42: #{tpu_custom_call.1} parent=1 // pred_check
      _
    $region43: #{tpu_custom_call.1} parent=1 // pred_check_branch
      %107 = sbr.rel (0) target = $region45
    $region44: #{tpu_custom_call.1} parent=1 // pred_region
      %109 = dma.done [#allocation6], 1024
    $region45: #{tpu_custom_call.1} parent=1 // pred_fallthru
      _
    // Predicated region
    $region46: #{tpu_custom_call.1} parent=1 // pred_check
      _
    $region47: #{tpu_custom_call.1} parent=1 // pred_check_branch
      %111 = sbr.rel (0) target = $region49
    $region48: #{tpu_custom_call.1} parent=1 // pred_region
      %113 = dma.done [#allocation9], 1024
    $region49: #{tpu_custom_call.1} parent=1 // pred_fallthru
      _
    // Predicated region
    $region50: #{tpu_custom_call.1} parent=1 // pred_check
      _
    $region51: #{tpu_custom_call.1} parent=1 // pred_check_branch
      %115 = sbr.rel (0) target = $region53
    $region52: #{tpu_custom_call.1} parent=1 // pred_region
      %117 = dma.done [#allocation9], 1024
    $region53: #{tpu_custom_call.1} parent=1 // pred_fallthru
      _
    // Predicated region
    $region54: #{tpu_custom_call.1} parent=1 // pred_check
      _
    $region55: #{tpu_custom_call.1} parent=1 // pred_check_branch
      %119 = sbr.rel (0) target = $region57
    $region56: #{tpu_custom_call.1} parent=1 // pred_region
      %121 = dma.done [#allocation12], 128
    $region57: #{tpu_custom_call.1} parent=1 // pred_fallthru
      _
    %v123 = vld [vmem:[#allocation11] sm:$0xff]
    %v124 = vld [vmem:[#allocation2] sm:$0xf]
    %v125 = vld [vmem:[#allocation2 + $0x4] sm:$0xf]
    %v126 = vld [vmem:[#allocation5] sm:$0xff]
    %v127 = vld [vmem:[#allocation5 + $0x8] sm:$0xf]
    %v128 = vld [vmem:[#allocation5 + $0xc] sm:$0xff]
    %v129 = vld [vmem:[#allocation5 + $0x14] sm:$0xf]
    %v130 = vld [vmem:[#allocation5 + $0x18] sm:$0xff]
    %v131 = vld [vmem:[#allocation5 + $0x20] sm:$0xf]
    %v132 = vld [vmem:[#allocation5 + $0x24] sm:$0xff]
    %v133 = vld [vmem:[#allocation5 + $0x2c] sm:$0xf]
    %v134 = vld [vmem:[#allocation5 + $0x30] sm:$0xff]
    %v135 = vld [vmem:[#allocation5 + $0x38] sm:$0xf]
    %v136 = vld [vmem:[#allocation5 + $0x3c] sm:$0xff]
    %v137 = vld [vmem:[#allocation5 + $0x44] sm:$0xf]
    %v138 = vld [vmem:[#allocation5 + $0x48] sm:$0xff]
    %v139 = vld [vmem:[#allocation5 + $0x50] sm:$0xf]
    %v140 = vld [vmem:[#allocation5 + $0x54] sm:$0xff]
    %v141 = vld [vmem:[#allocation5 + $0x5c] sm:$0xf]
    %v142 = vld [vmem:[#allocation5 + $0x60] sm:$0xff]
    %v143 = vld [vmem:[#allocation5 + $0x68] sm:$0xf]
    %v144 = vld [vmem:[#allocation5 + $0x6c] sm:$0xff]
    %v145 = vld [vmem:[#allocation5 + $0x74] sm:$0xf]
    %v146 = vld [vmem:[#allocation5 + $0x78] sm:$0xff]
    %v147 = vld [vmem:[#allocation5 + $0x80] sm:$0xf]
    %v148 = vld [vmem:[#allocation5 + $0x84] sm:$0xff]
    %v149 = vld [vmem:[#allocation5 + $0x8c] sm:$0xf]
    %v150 = vld [vmem:[#allocation5 + $0x90] sm:$0xff]
    %v151 = vld [vmem:[#allocation5 + $0x98] sm:$0xf]
    %v152 = vld [vmem:[#allocation5 + $0x9c] sm:$0xff]
    %v153 = vld [vmem:[#allocation5 + $0xa4] sm:$0xf]
    %v154 = vld [vmem:[#allocation5 + $0xa8] sm:$0xff]
    %v155 = vld [vmem:[#allocation5 + $0xb0] sm:$0xf]
    %v156 = vld [vmem:[#allocation5 + $0xb4] sm:$0xff]
    %v157 = vld [vmem:[#allocation5 + $0xbc] sm:$0xf]
    %v158 = vld [vmem:[%s5] sm:$0x7]
    %v160 = vperm.slane %v158, 0
    %v161 = vperm.slane %v158, 1
    %v162 = vperm.slane %v158, 2
    %v168 = vunpack.c.l.b16 %v124
    %v169 = vunpack.c.l.b16 %v125
    %v170 = vpack.c.b16 %v169, %v168
    %v204 = vunpack.c.l.b16 %v126
    %v205 = vunpack.c.h.b16 %v126
    %v206 = vunpack.c.l.b16 %v127
    %v207 = vunpack.c.l.b16 %v128
    %v208 = vunpack.c.h.b16 %v128
    %v209 = vunpack.c.l.b16 %v129
    %v210 = vunpack.c.l.b16 %v130
    %v211 = vunpack.c.h.b16 %v130
    %v212 = vunpack.c.l.b16 %v131
    %v213 = vunpack.c.l.b16 %v132
    %v214 = vunpack.c.h.b16 %v132
    %v215 = vunpack.c.l.b16 %v133
    %v216 = vunpack.c.l.b16 %v134
    %v217 = vunpack.c.h.b16 %v134
    %v218 = vunpack.c.l.b16 %v135
    %v219 = vunpack.c.l.b16 %v136
    %v220 = vunpack.c.h.b16 %v136
    %v221 = vunpack.c.l.b16 %v137
    %v222 = vunpack.c.l.b16 %v138
    %v223 = vunpack.c.h.b16 %v138
    %v224 = vunpack.c.l.b16 %v139
    %v225 = vunpack.c.l.b16 %v140
    %v226 = vunpack.c.h.b16 %v140
    %v227 = vunpack.c.l.b16 %v141
    %v228 = vunpack.c.l.b16 %v142
    %v229 = vunpack.c.h.b16 %v142
    %v230 = vunpack.c.l.b16 %v143
    %v231 = vunpack.c.l.b16 %v144
    %v232 = vunpack.c.h.b16 %v144
    %v233 = vunpack.c.l.b16 %v145
    %v234 = vunpack.c.l.b16 %v146
    %v235 = vunpack.c.h.b16 %v146
    %v236 = vunpack.c.l.b16 %v147
    %v237 = vunpack.c.l.b16 %v148
    %v238 = vunpack.c.h.b16 %v148
    %v239 = vunpack.c.l.b16 %v149
    %v240 = vunpack.c.l.b16 %v150
    %v241 = vunpack.c.h.b16 %v150
    %v242 = vunpack.c.l.b16 %v151
    %v243 = vunpack.c.l.b16 %v152
    %v244 = vunpack.c.h.b16 %v152
    %v245 = vunpack.c.l.b16 %v153
    %v246 = vunpack.c.l.b16 %v154
    %v247 = vunpack.c.h.b16 %v154
    %v248 = vunpack.c.l.b16 %v155
    %v249 = vunpack.c.l.b16 %v156
    %v250 = vunpack.c.h.b16 %v156
    %v251 = vunpack.c.l.b16 %v157
    %v252 = vpack.c.b16 %v207, %v204
    %v253 = vpack.c.b16 %v208, %v205
    %v254 = vpack.c.b16 %v209, %v206
    %v255 = vpack.c.b16 %v213, %v210
    %v256 = vpack.c.b16 %v214, %v211
    %v257 = vpack.c.b16 %v215, %v212
    %v258 = vpack.c.b16 %v219, %v216
    %v259 = vpack.c.b16 %v220, %v217
    %v260 = vpack.c.b16 %v221, %v218
    %v261 = vpack.c.b16 %v225, %v222
    %v262 = vpack.c.b16 %v226, %v223
    %v263 = vpack.c.b16 %v227, %v224
    %v264 = vpack.c.b16 %v231, %v228
    %v265 = vpack.c.b16 %v232, %v229
    %v266 = vpack.c.b16 %v233, %v230
    %v267 = vpack.c.b16 %v237, %v234
    %v268 = vpack.c.b16 %v238, %v235
    %v269 = vpack.c.b16 %v239, %v236
    %v270 = vpack.c.b16 %v243, %v240
    %v271 = vpack.c.b16 %v244, %v241
    %v272 = vpack.c.b16 %v245, %v242
    %v273 = vpack.c.b16 %v249, %v246
    %v274 = vpack.c.b16 %v250, %v247
    %v275 = vpack.c.b16 %v251, %v248
    %300 = vmatpush.bf16.msra.mxu0 %v273
    %301 = vmatpush.bf16.msra.mxu0 %v270
    %302 = vmatpush.bf16.msra.mxu0 %v267
    %303 = vmatpush.bf16.msra.mxu0 %v264
    %304 = vmatpush.bf16.msra.mxu0 %v261
    %305 = vmatpush.bf16.msra.mxu0 %v258
    %306 = vmatpush.bf16.msra.mxu0 %v255
    %307 = vmatpush.bf16.msra.mxu0 %v252
    %308 = vmatmul.bf16.gmra.mxu0 %v170
    %v309 = vpop.f32.mrf.mxu0
    %v310 = vadd.f32 %v160, %v309
    %v311 = vpop.f32.mrf.mxu0
    %v312 = vadd.f32 %v160, %v311
    %313 = vdwg.mxu0
    %314 = vmatpush.bf16.msra.mxu0 %v274
    %315 = vmatpush.bf16.msra.mxu0 %v271
    %316 = vmatpush.bf16.msra.mxu0 %v268
    %317 = vmatpush.bf16.msra.mxu0 %v265
    %318 = vmatpush.bf16.msra.mxu0 %v262
    %319 = vmatpush.bf16.msra.mxu0 %v259
    %320 = vmatpush.bf16.msra.mxu0 %v256
    %321 = vmatpush.bf16.msra.mxu0 %v253
    %322 = vmatmul.bf16.gmra.mxu0 %v170
    %v323 = vpop.f32.mrf.mxu0
    %v324 = vadd.f32 %v161, %v323
    %v325 = vpop.f32.mrf.mxu0
    %v326 = vadd.f32 %v161, %v325
    %327 = vdwg.mxu0
    %328 = vmatpush.bf16.msra.mxu0 %v275
    %329 = vmatpush.bf16.msra.mxu0 %v272
    %330 = vmatpush.bf16.msra.mxu0 %v269
    %331 = vmatpush.bf16.msra.mxu0 %v266
    %332 = vmatpush.bf16.msra.mxu0 %v263
    %333 = vmatpush.bf16.msra.mxu0 %v260
    %334 = vmatpush.bf16.msra.mxu0 %v257
    %335 = vmatpush.bf16.msra.mxu0 %v254
    %336 = vmatmul.bf16.gmra.mxu0 %v170
    %v337 = vpop.f32.mrf.mxu0
    %v338 = vadd.f32 %v162, %v337
    %v339 = vpop.f32.mrf.mxu0
    %v340 = vadd.f32 %v162, %v339
    %341 = vdwg.mxu0
    %v342 = vmul.f32 %v310, 0.17677669
    %v343 = vmul.f32 %v312, 0.17677669
    %v344 = vpack.c.bf16 %v342, %v342
    %v345 = vpack.c.bf16 %v343, %v343
    %v346 = vpack.c.bf16 %v324, %v324
    %v347 = vpack.c.bf16 %v326, %v326
    %v348 = vpack.c.bf16 %v338, %v338
    %v349 = vpack.c.bf16 %v340, %v340
    %350 = vmatpush.bf16.xpose.msra.mxu0 0
    %351 = vmatpush.bf16.xpose.msra.mxu0 0
    %352 = vmatpush.bf16.xpose.msra.mxu0 0
    %353 = vmatpush.bf16.xpose.msra.mxu0 0
    %354 = vmatpush.bf16.xpose.msra.mxu0 0
    %355 = vmatpush.bf16.xpose.msra.mxu0 0
    %356 = vmatpush.bf16.xpose.msra.mxu0 0
    %357 = vmatpush.bf16.xpose.msra.mxu0 %v346
    %358 = vmatmul.bf16.gmra.mxu0 %v344
    %v359 = vpop.f32.mrf.mxu0
    %v360 = vadd.f32 0.0, %v359
    %v361 = vpop.f32.mrf.mxu0
    %362 = vdwg.mxu0
    %363 = vmatpush.bf16.xpose.msra.mxu0 0
    %364 = vmatpush.bf16.xpose.msra.mxu0 0
    %365 = vmatpush.bf16.xpose.msra.mxu0 0
    %366 = vmatpush.bf16.xpose.msra.mxu0 0
    %367 = vmatpush.bf16.xpose.msra.mxu0 0
    %368 = vmatpush.bf16.xpose.msra.mxu0 0
    %369 = vmatpush.bf16.xpose.msra.mxu0 0
    %370 = vmatpush.bf16.xpose.msra.mxu0 %v347
    %371 = vmatmul.bf16.gmra.mxu0 %v345
    %v372 = vpop.f32.mrf.mxu0
    %v373 = vadd.f32 0.0, %v372
    %v374 = vpop.f32.mrf.mxu0
    %375 = vdwg.mxu0
    %vm376 = vcmask 64512
    %v377 = vsel %vm376, %v360, -inf
    %378 = vmax.xlane.f32.xlu0 %v377
    %v379 = vpop.xlane.xlu0 %378
    %v380 = vsel %vm376, %v373, -inf
    %381 = vmax.xlane.f32.xlu0 %v380
    %v382 = vpop.xlane.xlu0 %381
    %v383 = vsub.f32 %v360, %v379
    %v384 = vsub.f32 %v373, %v382
    %v385 = vmul.f32 %v383, 1.442695
    %v386 = vpow.pop %v385
    %v387 = vmul.f32 %v384, 1.442695
    %v388 = vpow.pop %v387
    %v389 = vsel %vm376, %v386, 0.0
    %390 = vadd.xlane.f32.xlu0 %v389
    %v391 = vpop.xlane.xlu0 %390
    %v392 = vsel %vm376, %v388, 0.0
    %393 = vadd.xlane.f32.xlu0 %v392
    %v394 = vpop.xlane.xlu0 %393
    %v395 = vrcp.pop %v391
    %v396 = vrcp.pop %v394
    %v397 = vmul.f32 %v386, %v395
    %v398 = vmul.f32 %v388, %v396
    %v399 = vpack.c.bf16 %v397, %v397
    %v400 = vpack.c.bf16 %v398, %v398
    %v402 = vsel %vm376, %v399, 0
    %vm404 = vcmask 1043456
    %v406 = vsel %vm404, %v348, 0
    %408 = vmatpush.bf16.msra.mxu0 0
    %409 = vmatpush.bf16.msra.mxu0 0
    %410 = vmatpush.bf16.msra.mxu0 0
    %411 = vmatpush.bf16.msra.mxu0 0
    %412 = vmatpush.bf16.msra.mxu0 0
    %413 = vmatpush.bf16.msra.mxu0 0
    %414 = vmatpush.bf16.msra.mxu0 0
    %415 = vmatpush.bf16.msra.mxu0 %v406
    %416 = vmatmul.bf16.gmra.mxu0 %v402
    %v417 = vpop.f32.mrf.mxu0
    %v418 = vadd.f32 0.0, %v417
    %v419 = vpop.f32.mrf.mxu0
    %420 = vdwg.mxu0
    %v422 = vsel %vm376, %v400, 0
    %v425 = vsel %vm404, %v349, 0
    %427 = vmatpush.bf16.msra.mxu0 0
    %428 = vmatpush.bf16.msra.mxu0 0
    %429 = vmatpush.bf16.msra.mxu0 0
    %430 = vmatpush.bf16.msra.mxu0 0
    %431 = vmatpush.bf16.msra.mxu0 0
    %432 = vmatpush.bf16.msra.mxu0 0
    %433 = vmatpush.bf16.msra.mxu0 0
    %434 = vmatpush.bf16.msra.mxu0 %v425
    %435 = vmatmul.bf16.gmra.mxu0 %v422
    %v436 = vpop.f32.mrf.mxu0
    %v437 = vadd.f32 0.0, %v436
    %v438 = vpop.f32.mrf.mxu0
    %439 = vdwg.mxu0
    %v440 = vpack.c.bf16 %v437, %v418
    %v441 = vld [vmem:[#allocation7] sm:$0xf]
    %v442 = vld [vmem:[#allocation7 + $0x4] sm:$0xf]
    %v443 = vld [vmem:[#allocation7 + $0x8] sm:$0xf]
    %v444 = vld [vmem:[#allocation7 + $0xc] sm:$0xf]
    %v445 = vld [vmem:[#allocation7 + $0x10] sm:$0xf]
    %v446 = vld [vmem:[#allocation7 + $0x14] sm:$0xf]
    %v447 = vld [vmem:[#allocation7 + $0x18] sm:$0xf]
    %v448 = vld [vmem:[#allocation7 + $0x1c] sm:$0xf]
    %v449 = vld [vmem:[#allocation7 + $0x20] sm:$0xf]
    %v450 = vld [vmem:[#allocation7 + $0x24] sm:$0xf]
    %v451 = vld [vmem:[#allocation7 + $0x28] sm:$0xf]
    %v452 = vld [vmem:[#allocation7 + $0x2c] sm:$0xf]
    %v453 = vld [vmem:[#allocation7 + $0x30] sm:$0xf]
    %v454 = vld [vmem:[#allocation7 + $0x34] sm:$0xf]
    %v455 = vld [vmem:[#allocation7 + $0x38] sm:$0xf]
    %v456 = vld [vmem:[#allocation7 + $0x3c] sm:$0xf]
    %v457 = vperm.slane %v123, 0
    %v474 = vunpack.c.l.b16 %v441
    %v475 = vunpack.c.l.b16 %v442
    %v476 = vunpack.c.l.b16 %v443
    %v477 = vunpack.c.l.b16 %v444
    %v478 = vunpack.c.l.b16 %v445
    %v479 = vunpack.c.l.b16 %v446
    %v480 = vunpack.c.l.b16 %v447
    %v481 = vunpack.c.l.b16 %v448
    %v482 = vunpack.c.l.b16 %v449
    %v483 = vunpack.c.l.b16 %v450
    %v484 = vunpack.c.l.b16 %v451
    %v485 = vunpack.c.l.b16 %v452
    %v486 = vunpack.c.l.b16 %v453
    %v487 = vunpack.c.l.b16 %v454
    %v488 = vunpack.c.l.b16 %v455
    %v489 = vunpack.c.l.b16 %v456
    %v490 = vpack.c.b16 %v475, %v474
    %v491 = vpack.c.b16 %v477, %v476
    %v492 = vpack.c.b16 %v479, %v478
    %v493 = vpack.c.b16 %v481, %v480
    %v494 = vpack.c.b16 %v483, %v482
    %v495 = vpack.c.b16 %v485, %v484
    %v496 = vpack.c.b16 %v487, %v486
    %v497 = vpack.c.b16 %v489, %v488
    %506 = vmatpush.bf16.msra.mxu0 %v497
    %507 = vmatpush.bf16.msra.mxu0 %v496
    %508 = vmatpush.bf16.msra.mxu0 %v495
    %509 = vmatpush.bf16.msra.mxu0 %v494
    %510 = vmatpush.bf16.msra.mxu0 %v493
    %511 = vmatpush.bf16.msra.mxu0 %v492
    %512 = vmatpush.bf16.msra.mxu0 %v491
    %513 = vmatpush.bf16.msra.mxu0 %v490
    %514 = vmatmul.bf16.gmra.mxu0 %v440
    %v515 = vpop.f32.mrf.mxu0
    %v516 = vadd.f32 %v457, %v515
    %v517 = vpop.f32.mrf.mxu0
    %v518 = vadd.f32 %v457, %v517
    %519 = vdwg.mxu0
    %v520 = vunpack.c.l.bf16 %v124
    %v521 = vunpack.c.l.bf16 %v125
    %v522 = vadd.f32 %v520, %v516
    %v523 = vadd.f32 %v521, %v518
    %524 = vadd.xlane.f32.xlu0 %v522
    %v525 = vpop.xlane.xlu0 %524
    %526 = vadd.xlane.f32.xlu0 %v523
    %v527 = vpop.xlane.xlu0 %526
    %v528 = vmul.f32 %v525, 0.03125
    %v529 = vmul.f32 %v527, 0.03125
    %v530 = vsub.f32 %v522, %v528
    %v531 = vsub.f32 %v523, %v529
    %v532 = vperm.slane %v123, 6
    %v533 = vmul.f32 %v530, %v532
    %v534 = vmul.f32 %v531, %v532
    %v535 = vmul.f32 %v533, %v533
    %v536 = vmul.f32 %v534, %v534
    %537 = vadd.xlane.f32.xlu0 %v535
    %v538 = vpop.xlane.xlu0 %537
    %539 = vadd.xlane.f32.xlu0 %v536
    %v540 = vpop.xlane.xlu0 %539
    %v541 = vmul.f32 %v538, 0.03125
    %v542 = vmul.f32 %v540, 0.03125
    %v543 = vadd.f32 %v541, 1e-05
    %v544 = vadd.f32 %v542, 1e-05
    %v545 = vrsqrt.pop %v543
    %v546 = vmul.f32 %v545, %v543
    %v547 = vmul.f32 %v546, %v545
    %v548 = vmul.f32 0.5, %v547
    %v549 = vsub.f32 1.5, %v548
    %v550 = vmul.f32 %v545, %v549
    %vm551 = vweird.f32 %v543
    %vm552 = vweird.f32 %v545
    %vm553 = vmor %vm551, %vm552
    %v554 = vsel %vm553, %v545, %v550
    %v555 = vrsqrt.pop %v544
    %v556 = vmul.f32 %v555, %v544
    %v557 = vmul.f32 %v556, %v555
    %v558 = vmul.f32 0.5, %v557
    %v559 = vsub.f32 1.5, %v558
    %v560 = vmul.f32 %v555, %v559
    %vm561 = vweird.f32 %v544
    %vm562 = vweird.f32 %v555
    %vm563 = vmor %vm561, %vm562
    %v564 = vsel %vm563, %v555, %v560
    %v565 = vmul.f32 %v533, %v554
    %v566 = vmul.f32 %v534, %v564
    %v567 = vperm.slane %v123, 2
    %v568 = vmul.f32 %v565, %v567
    %v569 = vmul.f32 %v566, %v567
    %v570 = vperm.slane %v123, 3
    %v571 = vadd.f32 %v568, %v570
    %v572 = vadd.f32 %v569, %v570
    %v573 = vpack.c.bf16 %v572, %v571
    %v574 = vld [vmem:[#allocation8] sm:$0xf]
    %v575 = vld [vmem:[#allocation8 + $0x4] sm:$0xf]
    %v576 = vld [vmem:[#allocation8 + $0x8] sm:$0xf]
    %v577 = vld [vmem:[#allocation8 + $0xc] sm:$0xf]
    %v578 = vld [vmem:[#allocation8 + $0x10] sm:$0xf]
    %v579 = vld [vmem:[#allocation8 + $0x14] sm:$0xf]
    %v580 = vld [vmem:[#allocation8 + $0x18] sm:$0xf]
    %v581 = vld [vmem:[#allocation8 + $0x1c] sm:$0xf]
    %v582 = vld [vmem:[#allocation8 + $0x20] sm:$0xf]
    %v583 = vld [vmem:[#allocation8 + $0x24] sm:$0xf]
    %v584 = vld [vmem:[#allocation8 + $0x28] sm:$0xf]
    %v585 = vld [vmem:[#allocation8 + $0x2c] sm:$0xf]
    %v586 = vld [vmem:[#allocation8 + $0x30] sm:$0xf]
    %v587 = vld [vmem:[#allocation8 + $0x34] sm:$0xf]
    %v588 = vld [vmem:[#allocation8 + $0x38] sm:$0xf]
    %v589 = vld [vmem:[#allocation8 + $0x3c] sm:$0xf]
    %v590 = vld [vmem:[%s6] sm:$0x1]
    %v592 = vperm.slane %v590, 0
    %v610 = vunpack.c.l.b16 %v574
    %v611 = vunpack.c.l.b16 %v575
    %v612 = vunpack.c.l.b16 %v576
    %v613 = vunpack.c.l.b16 %v577
    %v614 = vunpack.c.l.b16 %v578
    %v615 = vunpack.c.l.b16 %v579
    %v616 = vunpack.c.l.b16 %v580
    %v617 = vunpack.c.l.b16 %v581
    %v618 = vunpack.c.l.b16 %v582
    %v619 = vunpack.c.l.b16 %v583
    %v620 = vunpack.c.l.b16 %v584
    %v621 = vunpack.c.l.b16 %v585
    %v622 = vunpack.c.l.b16 %v586
    %v623 = vunpack.c.l.b16 %v587
    %v624 = vunpack.c.l.b16 %v588
    %v625 = vunpack.c.l.b16 %v589
    %v626 = vpack.c.b16 %v611, %v610
    %v627 = vpack.c.b16 %v613, %v612
    %v628 = vpack.c.b16 %v615, %v614
    %v629 = vpack.c.b16 %v617, %v616
    %v630 = vpack.c.b16 %v619, %v618
    %v631 = vpack.c.b16 %v621, %v620
    %v632 = vpack.c.b16 %v623, %v622
    %v633 = vpack.c.b16 %v625, %v624
    %642 = vmatpush.bf16.msra.mxu0 %v633
    %643 = vmatpush.bf16.msra.mxu0 %v632
    %644 = vmatpush.bf16.msra.mxu0 %v631
    %645 = vmatpush.bf16.msra.mxu0 %v630
    %646 = vmatpush.bf16.msra.mxu0 %v629
    %647 = vmatpush.bf16.msra.mxu0 %v628
    %648 = vmatpush.bf16.msra.mxu0 %v627
    %649 = vmatpush.bf16.msra.mxu0 %v626
    %650 = vmatmul.bf16.gmra.mxu0 %v573
    %v651 = vpop.f32.mrf.mxu0
    %v652 = vadd.f32 %v592, %v651
    %v653 = vpop.f32.mrf.mxu0
    %v654 = vadd.f32 %v592, %v653
    %655 = vdwg.mxu0
    %v656 = vmax.f32 %v652, 0.0
    %v657 = vmax.f32 %v654, 0.0
    %v658 = vpack.c.bf16 %v657, %v656
    %v659 = vld [vmem:[#allocation10] sm:$0xf]
    %v660 = vld [vmem:[#allocation10 + $0x4] sm:$0xf]
    %v661 = vld [vmem:[#allocation10 + $0x8] sm:$0xf]
    %v662 = vld [vmem:[#allocation10 + $0xc] sm:$0xf]
    %v663 = vld [vmem:[#allocation10 + $0x10] sm:$0xf]
    %v664 = vld [vmem:[#allocation10 + $0x14] sm:$0xf]
    %v665 = vld [vmem:[#allocation10 + $0x18] sm:$0xf]
    %v666 = vld [vmem:[#allocation10 + $0x1c] sm:$0xf]
    %v667 = vld [vmem:[#allocation10 + $0x20] sm:$0xf]
    %v668 = vld [vmem:[#allocation10 + $0x24] sm:$0xf]
    %v669 = vld [vmem:[#allocation10 + $0x28] sm:$0xf]
    %v670 = vld [vmem:[#allocation10 + $0x2c] sm:$0xf]
    %v671 = vld [vmem:[#allocation10 + $0x30] sm:$0xf]
    %v672 = vld [vmem:[#allocation10 + $0x34] sm:$0xf]
    %v673 = vld [vmem:[#allocation10 + $0x38] sm:$0xf]
    %v674 = vld [vmem:[#allocation10 + $0x3c] sm:$0xf]
    %v675 = vperm.slane %v123, 1
    %v692 = vunpack.c.l.b16 %v659
    %v693 = vunpack.c.l.b16 %v660
    %v694 = vunpack.c.l.b16 %v661
    %v695 = vunpack.c.l.b16 %v662
    %v696 = vunpack.c.l.b16 %v663
    %v697 = vunpack.c.l.b16 %v664
    %v698 = vunpack.c.l.b16 %v665
    %v699 = vunpack.c.l.b16 %v666
    %v700 = vunpack.c.l.b16 %v667
    %v701 = vunpack.c.l.b16 %v668
    %v702 = vunpack.c.l.b16 %v669
    %v703 = vunpack.c.l.b16 %v670
    %v704 = vunpack.c.l.b16 %v671
    %v705 = vunpack.c.l.b16 %v672
    %v706 = vunpack.c.l.b16 %v673
    %v707 = vunpack.c.l.b16 %v674
    %v708 = vpack.c.b16 %v693, %v692
    %v709 = vpack.c.b16 %v695, %v694
    %v710 = vpack.c.b16 %v697, %v696
    %v711 = vpack.c.b16 %v699, %v698
    %v712 = vpack.c.b16 %v701, %v700
    %v713 = vpack.c.b16 %v703, %v702
    %v714 = vpack.c.b16 %v705, %v704
    %v715 = vpack.c.b16 %v707, %v706
    %724 = vmatpush.bf16.msra.mxu0 %v715
    %725 = vmatpush.bf16.msra.mxu0 %v714
    %726 = vmatpush.bf16.msra.mxu0 %v713
    %727 = vmatpush.bf16.msra.mxu0 %v712
    %728 = vmatpush.bf16.msra.mxu0 %v711
    %729 = vmatpush.bf16.msra.mxu0 %v710
    %730 = vmatpush.bf16.msra.mxu0 %v709
    %731 = vmatpush.bf16.msra.mxu0 %v708
    %732 = vmatmul.bf16.gmra.mxu0 %v658
    %v733 = vpop.f32.mrf.mxu0
    %v734 = vadd.f32 %v675, %v733
    %v735 = vpop.f32.mrf.mxu0
    %v736 = vadd.f32 %v675, %v735
    %737 = vdwg.mxu0
    %v738 = vadd.f32 %v571, %v734
    %v739 = vadd.f32 %v572, %v736
    %740 = vadd.xlane.f32.xlu0 %v738
    %v741 = vpop.xlane.xlu0 %740
    %742 = vadd.xlane.f32.xlu0 %v739
    %v743 = vpop.xlane.xlu0 %742
    %v744 = vmul.f32 %v741, 0.03125
    %v745 = vmul.f32 %v743, 0.03125
    %v746 = vsub.f32 %v738, %v744
    %v747 = vsub.f32 %v739, %v745
    %v748 = vmul.f32 %v746, %v532
    %v749 = vmul.f32 %v747, %v532
    %v750 = vmul.f32 %v748, %v748
    %v751 = vmul.f32 %v749, %v749
    %752 = vadd.xlane.f32.xlu0 %v750
    %v753 = vpop.xlane.xlu0 %752
    %754 = vadd.xlane.f32.xlu0 %v751
    %v755 = vpop.xlane.xlu0 %754
    %v756 = vmul.f32 %v753, 0.03125
    %v757 = vmul.f32 %v755, 0.03125
    %v758 = vadd.f32 %v756, 1e-05
    %v759 = vadd.f32 %v757, 1e-05
    %v760 = vrsqrt.pop %v758
    %v761 = vmul.f32 %v760, %v758
    %v762 = vmul.f32 %v761, %v760
    %v763 = vmul.f32 0.5, %v762
    %v764 = vsub.f32 1.5, %v763
    %v765 = vmul.f32 %v760, %v764
    %vm766 = vweird.f32 %v758
    %vm767 = vweird.f32 %v760
    %vm768 = vmor %vm766, %vm767
    %v769 = vsel %vm768, %v760, %v765
    %v770 = vrsqrt.pop %v759
    %v771 = vmul.f32 %v770, %v759
    %v772 = vmul.f32 %v771, %v770
    %v773 = vmul.f32 0.5, %v772
    %v774 = vsub.f32 1.5, %v773
    %v775 = vmul.f32 %v770, %v774
    %vm776 = vweird.f32 %v759
    %vm777 = vweird.f32 %v770
    %vm778 = vmor %vm776, %vm777
    %v779 = vsel %vm778, %v770, %v775
    %v780 = vmul.f32 %v748, %v769
    %v781 = vmul.f32 %v749, %v779
    %v782 = vperm.slane %v123, 4
    %v783 = vmul.f32 %v780, %v782
    %v784 = vmul.f32 %v781, %v782
    %v785 = vperm.slane %v123, 5
    %v786 = vadd.f32 %v783, %v785
    %v787 = vadd.f32 %v784, %v785
    %788 = vst [vmem:[#allocation13] sm:$0xff] %v786
    %789 = vst [vmem:[#allocation13 + $0x8] sm:$0xff] %v787
    // Predicated region
    $region58: #{tpu_custom_call.1} parent=1 // pred_check
      _
    $region59: #{tpu_custom_call.1} parent=1 // pred_check_branch
      %791 = sbr.rel (0) target = $region61
    $region60: #{tpu_custom_call.1} parent=1 // pred_region
      %793 = vsyncadd [#allocation4], 0
      %s794 = sshll.u32 [#allocation13], 4
      %s795 = int_to_ptr.vmem [resolvable:$true] %s794
      %s796 = sshll.u32 %s8, 4
      %s797 = int_to_ptr.hbm [resolvable:$true] %s796
      %802 = dma.vmem_to_hbm [thread:$0]  %s795, 256, %s797, [#allocation4], 128, 128, 8
    $region61: #{tpu_custom_call.1} parent=1 // pred_fallthru
      _
    // Predicated region
    $region62: #{tpu_custom_call.1} parent=1 // pred_check
      _
    $region63: #{tpu_custom_call.1} parent=1 // pred_check_branch
      %804 = sbr.rel (0) target = $region65
    $region64: #{tpu_custom_call.1} parent=1 // pred_region
      %806 = dma.done [#allocation4], 256
    $region65: #{tpu_custom_call.1} parent=1 // pred_fallthru
      _
    %807 = vsyncpa [#allocation3], 1
    %808 = vsyncpa [#allocation6], 1
    %809 = vsyncpa [#allocation9], 1
    %810 = vsyncpa [#allocation12], 1
    %811 = vsyncpa [#allocation4], 1

// kernel: tpu_custom_call.1
$region0: #{tpu_custom_call.1}
  #allocation0 [shape = 'u32[]', space=smem, size = 0x4, offset = 0x4, fixed_abs, tag = 'smem constant byte address 0x4 - core index']
  #allocation1 [shape = 'u32[72,128]{1,0:T(1,128)}', space=vmem, size = 0x9000, scoped, tag = 'internal scratch']
  %s0 = inlined_call_operand.hbm [shape: bf16[2,8,128], index: 0, kind: input, shape index: {}]
  %s1 = inlined_call_operand.hbm [shape: bf16[128,384], index: 1, kind: input, shape index: {}]
  %s2 = inlined_call_operand.hbm [shape: bf16[128,128], index: 2, kind: input, shape index: {}]
  %s3 = inlined_call_operand.hbm [shape: bf16[128,128], index: 3, kind: input, shape index: {}]
  %s4 = inlined_call_operand.hbm [shape: bf16[128,128], index: 4, kind: input, shape index: {}]
  %s5 = inlined_call_operand.vmem [shape: f32[1,384], index: 5, kind: input, shape index: {}]
  %s6 = inlined_call_operand.vmem [shape: f32[1,128], index: 6, kind: input, shape index: {}]
  %s7 = inlined_call_operand.hbm [shape: f32[8,128], index: 7, kind: input, shape index: {}]
  %s8 = inlined_call_operand.hbm [shape: f32[2,8,128], index: 8, kind: output, shape index: {}]
  %s9 = sld [smem:[#allocation0]]
  $region66: #{tpu_custom_call.1} parent=0
    _
  %s11 = ssub.s32 1, %s9
  %s12 = scalar_select 0, %s11, %s9
  $region1: #{tpu_custom_call.1} parent=0
    #allocation2 [shape = 'u8[4096]{0}', space=vmem, size = 0x1000, scoped, tag = 'input window, operand 0, single buffered']
    #allocation3 [shape = 's32[1]{0}', space=sflag, size = 0x4, scoped, tag = 'scoped memory for tpu_custom_call.1']
    #allocation4 [shape = 's32[1]{0}', space=sflag, size = 0x4, scoped, tag = 'scoped memory for tpu_custom_call.1']
    #allocation5 [shape = 'u8[98304]{0}', space=vmem, size = 0x18000, scoped, tag = 'input window, operand 1, single buffered']
    #allocation6 [shape = 's32[1]{0}', space=sflag, size = 0x4, scoped, tag = 'scoped memory for tpu_custom_call.1']
    #allocation7 [shape = 'u8[32768]{0}', space=vmem, size = 0x8000, scoped, tag = 'input window, operand 2, single buffered']
    #allocation8 [shape = 'u8[32768]{0}', space=vmem, size = 0x8000, scoped, tag = 'input window, operand 3, single buffered']
    #allocation9 [shape = 's32[1]{0}', space=sflag, size = 0x4, scoped, tag = 'scoped memory for tpu_custom_call.1']
    #allocation10 [shape = 'u8[32768]{0}', space=vmem, size = 0x8000, scoped, tag = 'input window, operand 4, single buffered']
    #allocation11 [shape = 'u8[4096]{0}', space=vmem, size = 0x1000, scoped, tag = 'input window, operand 7, single buffered']
    #allocation12 [shape = 's32[1]{0}', space=sflag, size = 0x4, scoped, tag = 'scoped memory for tpu_custom_call.1']
    #allocation13 [shape = 'u8[8192]{0}', space=vmem, size = 0x2000, scoped, tag = 'output window, operand 0, single buffered']
    %13 = vsyncpa [#allocation3], 0
    %14 = vsyncpa [#allocation6], 0
    %15 = vsyncpa [#allocation9], 0
    %16 = vsyncpa [#allocation12], 0
    %17 = vsyncpa [#allocation4], 0
    // Predicated region
    $region2: #{tpu_custom_call.1} parent=1 // pred_check
      _
    $region3: #{tpu_custom_call.1} parent=1 // pred_check_branch
      %19 = sbr.rel (0) target = $region5
    $region4: #{tpu_custom_call.1} parent=1 // pred_region
      %21 = vsyncadd [#allocation3], 0
      %s22 = sshll.u32 %s0, 4
      %s23 = int_to_ptr.hbm [resolvable:$true] %s22
      %s24 = sshll.u32 [#allocation2], 4
      %s25 = int_to_ptr.vmem [resolvable:$true] %s24
      %30 = dma.hbm_to_vmem [thread:$0]  %s23, 128, %s25, [#allocation3], 64, 64, 4
    $region5: #{tpu_custom_call.1} parent=1 // pred_fallthru
      _
    // Predicated region
    $region6: #{tpu_custom_call.1} parent=1 // pred_check
      _
    $region7: #{tpu_custom_call.1} parent=1 // pred_check_branch
      %32 = sbr.rel (0) target = $region9
    $region8: #{tpu_custom_call.1} parent=1 // pred_region
      %34 = vsyncadd [#allocation6], 0
      %s35 = sshll.u32 %s1, 4
      %s36 = int_to_ptr.hbm [resolvable:$true] %s35
      %s37 = sshll.u32 [#allocation5], 4
      %s38 = int_to_ptr.vmem [resolvable:$true] %s37
      %43 = dma.hbm_to_vmem [thread:$0]  %s36, 3072, %s38, [#allocation6], 192, 192, 12
    $region9: #{tpu_custom_call.1} parent=1 // pred_fallthru
      _
    // Predicated region
    $region10: #{tpu_custom_call.1} parent=1 // pred_check
      _
    $region11: #{tpu_custom_call.1} parent=1 // pred_check_branch
      %45 = sbr.rel (0) target = $region13
    $region12: #{tpu_custom_call.1} parent=1 // pred_region
      %47 = vsyncadd [#allocation6], 0
      %s48 = sshll.u32 %s2, 4
      %s49 = int_to_ptr.hbm [resolvable:$true] %s48
      %s50 = sshll.u32 [#allocation7], 4
      %s51 = int_to_ptr.vmem [resolvable:$true] %s50
      %56 = dma.hbm_to_vmem [thread:$0]  %s49, 1024, %s51, [#allocation6], 64, 64, 4
    $region13: #{tpu_custom_call.1} parent=1 // pred_fallthru
      _
    // Predicated region
    $region14: #{tpu_custom_call.1} parent=1 // pred_check
      _
    $region15: #{tpu_custom_call.1} parent=1 // pred_check_branch
      %58 = sbr.rel (0) target = $region17
    $region16: #{tpu_custom_call.1} parent=1 // pred_region
      %60 = vsyncadd [#allocation9], 0
      %s61 = sshll.u32 %s3, 4
      %s62 = int_to_ptr.hbm [resolvable:$true] %s61
      %s63 = sshll.u32 [#allocation8], 4
      %s64 = int_to_ptr.vmem [resolvable:$true] %s63
      %69 = dma.hbm_to_vmem [thread:$0]  %s62, 1024, %s64, [#allocation9], 64, 64, 4
    $region17: #{tpu_custom_call.1} parent=1 // pred_fallthru
      _
    // Predicated region
    $region18: #{tpu_custom_call.1} parent=1 // pred_check
      _
    $region19: #{tpu_custom_call.1} parent=1 // pred_check_branch
      %71 = sbr.rel (0) target = $region21
    $region20: #{tpu_custom_call.1} parent=1 // pred_region
      %73 = vsyncadd [#allocation9], 0
      %s74 = sshll.u32 %s4, 4
      %s75 = int_to_ptr.hbm [resolvable:$true] %s74
      %s76 = sshll.u32 [#allocation10], 4
      %s77 = int_to_ptr.vmem [resolvable:$true] %s76
      %82 = dma.hbm_to_vmem [thread:$0]  %s75, 1024, %s77, [#allocation9], 64, 64, 4
    $region21: #{tpu_custom_call.1} parent=1 // pred_fallthru
      _
    // Predicated region
    $region22: #{tpu_custom_call.1} parent=1 // pred_check
      _
    $region23: #{tpu_custom_call.1} parent=1 // pred_check_branch
      %84 = sbr.rel (0) target = $region25
    $region24: #{tpu_custom_call.1} parent=1 // pred_region
      _
    $region25: #{tpu_custom_call.1} parent=1 // pred_fallthru
      _
    // Predicated region
    $region26: #{tpu_custom_call.1} parent=1 // pred_check
      _
    $region27: #{tpu_custom_call.1} parent=1 // pred_check_branch
      %86 = sbr.rel (0) target = $region29
    $region28: #{tpu_custom_call.1} parent=1 // pred_region
      _
    $region29: #{tpu_custom_call.1} parent=1 // pred_fallthru
      _
    // Predicated region
    $region30: #{tpu_custom_call.1} parent=1 // pred_check
      _
    $region31: #{tpu_custom_call.1} parent=1 // pred_check_branch
      %88 = sbr.rel (0) target = $region33
    $region32: #{tpu_custom_call.1} parent=1 // pred_region
      %90 = vsyncadd [#allocation12], 0
      %s92 = sshll.u32 %s7, 4
      %s93 = int_to_ptr.hbm [resolvable:$true] %s92
      %s94 = sshll.u32 [#allocation11], 4
      %s95 = int_to_ptr.vmem [resolvable:$true] %s94
      %97 = dma.hbm_to_vmem [thread:$0]  %s93, 128, %s95, [#allocation12]
    $region33: #{tpu_custom_call.1} parent=1 // pred_fallthru
      _
    // Predicated region
    $region34: #{tpu_custom_call.1} parent=1 // pred_check
      _
    $region35: #{tpu_custom_call.1} parent=1 // pred_check_branch
      %99 = sbr.rel (0) target = $region37
    $region36: #{tpu_custom_call.1} parent=1 // pred_region
      %101 = dma.done [#allocation3], 128
    $region37: #{tpu_custom_call.1} parent=1 // pred_fallthru
      _
    // Predicated region
    $region38: #{tpu_custom_call.1} parent=1 // pred_check
      _
    $region39: #{tpu_custom_call.1} parent=1 // pred_check_branch
      %103 = sbr.rel (0) target = $region41
    $region40: #{tpu_custom_call.1} parent=1 // pred_region
      %105 = dma.done [#allocation6], 3072
    $region41: #{tpu_custom_call.1} parent=1 // pred_fallthru
      _
    // Predicated region
    $region42: #{tpu_custom_call.1} parent=1 // pred_check
      _
    $region43: #{tpu_custom_call.1} parent=1 // pred_check_branch
      %107 = sbr.rel (0) target = $region45
    $region44: #{tpu_custom_call.1} parent=1 // pred_region
      %109 = dma.done [#allocation6], 1024
    $region45: #{tpu_custom_call.1} parent=1 // pred_fallthru
      _
    // Predicated region
    $region46: #{tpu_custom_call.1} parent=1 // pred_check
      _
    $region47: #{tpu_custom_call.1} parent=1 // pred_check_branch
      %111 = sbr.rel (0) target = $region49
    $region48: #{tpu_custom_call.1} parent=1 // pred_region
      %113 = dma.done [#allocation9], 1024
    $region49: #{tpu_custom_call.1} parent=1 // pred_fallthru
      _
    // Predicated region
    $region50: #{tpu_custom_call.1} parent=1 // pred_check
      _
    $region51: #{tpu_custom_call.1} parent=1 // pred_check_branch
      %115 = sbr.rel (0) target = $region53
    $region52: #{tpu_custom_call.1} parent=1 // pred_region
      %117 = dma.done [#allocation9], 1024
    $region53: #{tpu_custom_call.1} parent=1 // pred_fallthru
      _
    // Predicated region
    $region54: #{tpu_custom_call.1} parent=1 // pred_check
      _
    $region55: #{tpu_custom_call.1} parent=1 // pred_check_branch
      %119 = sbr.rel (0) target = $region57
    $region56: #{tpu_custom_call.1} parent=1 // pred_region
      %121 = dma.done [#allocation12], 128
    $region57: #{tpu_custom_call.1} parent=1 // pred_fallthru
      _
    %v123 = vld [vmem:[#allocation11] sm:$0xff]
    %v124 = vld [vmem:[#allocation2] sm:$0xf]
    %v125 = vld [vmem:[#allocation2 + $0x4] sm:$0xf]
    %v126 = vld [vmem:[#allocation5] sm:$0xff]
    %v127 = vld [vmem:[#allocation5 + $0x8] sm:$0xf]
    %v128 = vld [vmem:[#allocation5 + $0xc] sm:$0xff]
    %v129 = vld [vmem:[#allocation5 + $0x14] sm:$0xf]
    %v130 = vld [vmem:[#allocation5 + $0x18] sm:$0xff]
    %v131 = vld [vmem:[#allocation5 + $0x20] sm:$0xf]
    %v132 = vld [vmem:[#allocation5 + $0x24] sm:$0xff]
    %v133 = vld [vmem:[#allocation5 + $0x2c] sm:$0xf]
    %v134 = vld [vmem:[#allocation5 + $0x30] sm:$0xff]
    %v135 = vld [vmem:[#allocation5 + $0x38] sm:$0xf]
    %v136 = vld [vmem:[#allocation5 + $0x3c] sm:$0xff]
    %v137 = vld [vmem:[#allocation5 + $0x44] sm:$0xf]
    %v138 = vld [vmem:[#allocation5 + $0x48] sm:$0xff]
    %v139 = vld [vmem:[#allocation5 + $0x50] sm:$0xf]
    %v140 = vld [vmem:[#allocation5 + $0x54] sm:$0xff]
    %v141 = vld [vmem:[#allocation5 + $0x5c] sm:$0xf]
    %v142 = vld [vmem:[#allocation5 + $0x60] sm:$0xff]
    %v143 = vld [vmem:[#allocation5 + $0x68] sm:$0xf]
    %v144 = vld [vmem:[#allocation5 + $0x6c] sm:$0xff]
    %v145 = vld [vmem:[#allocation5 + $0x74] sm:$0xf]
    %v146 = vld [vmem:[#allocation5 + $0x78] sm:$0xff]
    %v147 = vld [vmem:[#allocation5 + $0x80] sm:$0xf]
    %v148 = vld [vmem:[#allocation5 + $0x84] sm:$0xff]
    %v149 = vld [vmem:[#allocation5 + $0x8c] sm:$0xf]
    %v150 = vld [vmem:[#allocation5 + $0x90] sm:$0xff]
    %v151 = vld [vmem:[#allocation5 + $0x98] sm:$0xf]
    %v152 = vld [vmem:[#allocation5 + $0x9c] sm:$0xff]
    %v153 = vld [vmem:[#allocation5 + $0xa4] sm:$0xf]
    %v154 = vld [vmem:[#allocation5 + $0xa8] sm:$0xff]
    %v155 = vld [vmem:[#allocation5 + $0xb0] sm:$0xf]
    %v156 = vld [vmem:[#allocation5 + $0xb4] sm:$0xff]
    %v157 = vld [vmem:[#allocation5 + $0xbc] sm:$0xf]
    %v158 = vld [vmem:[%s5] sm:$0x7]
    %v160 = vperm.slane %v158, 0
    %v161 = vperm.slane %v158, 1
    %v162 = vperm.slane %v158, 2
    %v168 = vunpack.c.l.b16 %v124
    %v169 = vunpack.c.l.b16 %v125
    %v170 = vpack.c.b16 %v169, %v168
    %v204 = vunpack.c.l.b16 %v126
    %v205 = vunpack.c.h.b16 %v126
    %v206 = vunpack.c.l.b16 %v127
    %v207 = vunpack.c.l.b16 %v128
    %v208 = vunpack.c.h.b16 %v128
    %v209 = vunpack.c.l.b16 %v129
    %v210 = vunpack.c.l.b16 %v130
    %v211 = vunpack.c.h.b16 %v130
    %v212 = vunpack.c.l.b16 %v131
    %v213 = vunpack.c.l.b16 %v132
    %v214 = vunpack.c.h.b16 %v132
    %v215 = vunpack.c.l.b16 %v133
    %v216 = vunpack.c.l.b16 %v134
    %v217 = vunpack.c.h.b16 %v134
    %v218 = vunpack.c.l.b16 %v135
    %v219 = vunpack.c.l.b16 %v136
    %v220 = vunpack.c.h.b16 %v136
    %v221 = vunpack.c.l.b16 %v137
    %v222 = vunpack.c.l.b16 %v138
    %v223 = vunpack.c.h.b16 %v138
    %v224 = vunpack.c.l.b16 %v139
    %v225 = vunpack.c.l.b16 %v140
    %v226 = vunpack.c.h.b16 %v140
    %v227 = vunpack.c.l.b16 %v141
    %v228 = vunpack.c.l.b16 %v142
    %v229 = vunpack.c.h.b16 %v142
    %v230 = vunpack.c.l.b16 %v143
    %v231 = vunpack.c.l.b16 %v144
    %v232 = vunpack.c.h.b16 %v144
    %v233 = vunpack.c.l.b16 %v145
    %v234 = vunpack.c.l.b16 %v146
    %v235 = vunpack.c.h.b16 %v146
    %v236 = vunpack.c.l.b16 %v147
    %v237 = vunpack.c.l.b16 %v148
    %v238 = vunpack.c.h.b16 %v148
    %v239 = vunpack.c.l.b16 %v149
    %v240 = vunpack.c.l.b16 %v150
    %v241 = vunpack.c.h.b16 %v150
    %v242 = vunpack.c.l.b16 %v151
    %v243 = vunpack.c.l.b16 %v152
    %v244 = vunpack.c.h.b16 %v152
    %v245 = vunpack.c.l.b16 %v153
    %v246 = vunpack.c.l.b16 %v154
    %v247 = vunpack.c.h.b16 %v154
    %v248 = vunpack.c.l.b16 %v155
    %v249 = vunpack.c.l.b16 %v156
    %v250 = vunpack.c.h.b16 %v156
    %v251 = vunpack.c.l.b16 %v157
    %v252 = vpack.c.b16 %v207, %v204
    %v253 = vpack.c.b16 %v208, %v205
    %v254 = vpack.c.b16 %v209, %v206
    %v255 = vpack.c.b16 %v213, %v210
    %v256 = vpack.c.b16 %v214, %v211
    %v257 = vpack.c.b16 %v215, %v212
    %v258 = vpack.c.b16 %v219, %v216
    %v259 = vpack.c.b16 %v220, %v217
    %v260 = vpack.c.b16 %v221, %v218
    %v261 = vpack.c.b16 %v225, %v222
    %v262 = vpack.c.b16 %v226, %v223
    %v263 = vpack.c.b16 %v227, %v224
    %v264 = vpack.c.b16 %v231, %v228
    %v265 = vpack.c.b16 %v232, %v229
    %v266 = vpack.c.b16 %v233, %v230
    %v267 = vpack.c.b16 %v237, %v234
    %v268 = vpack.c.b16 %v238, %v235
    %v269 = vpack.c.b16 %v239, %v236
    %v270 = vpack.c.b16 %v243, %v240
    %v271 = vpack.c.b16 %v244, %v241
    %v272 = vpack.c.b16 %v245, %v242
    %v273 = vpack.c.b16 %v249, %v246
    %v274 = vpack.c.b16 %v250, %v247
    %v275 = vpack.c.b16 %v251, %v248
    %300 = vmatpush.bf16.msra.mxu0 %v273
    %301 = vmatpush.bf16.msra.mxu0 %v270
    %302 = vmatpush.bf16.msra.mxu0 %v267
    %303 = vmatpush.bf16.msra.mxu0 %v264
    %304 = vmatpush.bf16.msra.mxu0 %v261
    %305 = vmatpush.bf16.msra.mxu0 %v258
    %306 = vmatpush.bf16.msra.mxu0 %v255
    %307 = vmatpush.bf16.msra.mxu0 %v252
    %308 = vmatmul.bf16.gmra.mxu0 %v170
    %v309 = vpop.f32.mrf.mxu0
    %v310 = vadd.f32 %v160, %v309
    %v311 = vpop.f32.mrf.mxu0
    %v312 = vadd.f32 %v160, %v311
    %313 = vdwg.mxu0
    %314 = vmatpush.bf16.msra.mxu0 %v274
    %315 = vmatpush.bf16.msra.mxu0 %v271
    %316 = vmatpush.bf16.msra.mxu0 %v268
    %317 = vmatpush.bf16.msra.mxu0 %v265
    %318 = vmatpush.bf16.msra.mxu0 %v262
    %319 = vmatpush.bf16.msra.mxu0 %v259
    %320 = vmatpush.bf16.msra.mxu0 %v256
    %321 = vmatpush.bf16.msra.mxu0 %v253
    %322 = vmatmul.bf16.gmra.mxu0 %v170
    %v323 = vpop.f32.mrf.mxu0
    %v324 = vadd.f32 %v161, %v323
    %v325 = vpop.f32.mrf.mxu0
    %v326 = vadd.f32 %v161, %v325
    %327 = vdwg.mxu0
    %328 = vmatpush.bf16.msra.mxu0 %v275
    %329 = vmatpush.bf16.msra.mxu0 %v272
    %330 = vmatpush.bf16.msra.mxu0 %v269
    %331 = vmatpush.bf16.msra.mxu0 %v266
    %332 = vmatpush.bf16.msra.mxu0 %v263
    %333 = vmatpush.bf16.msra.mxu0 %v260
    %334 = vmatpush.bf16.msra.mxu0 %v257
    %335 = vmatpush.bf16.msra.mxu0 %v254
    %336 = vmatmul.bf16.gmra.mxu0 %v170
    %v337 = vpop.f32.mrf.mxu0
    %v338 = vadd.f32 %v162, %v337
    %v339 = vpop.f32.mrf.mxu0
    %v340 = vadd.f32 %v162, %v339
    %341 = vdwg.mxu0
    %v342 = vmul.f32 %v310, 0.17677669
    %v343 = vmul.f32 %v312, 0.17677669
    %v344 = vpack.c.bf16 %v342, %v342
    %v345 = vpack.c.bf16 %v343, %v343
    %v346 = vpack.c.bf16 %v324, %v324
    %v347 = vpack.c.bf16 %v326, %v326
    %v348 = vpack.c.bf16 %v338, %v338
    %v349 = vpack.c.bf16 %v340, %v340
    %350 = vmatpush.bf16.xpose.msra.mxu0 0
    %351 = vmatpush.bf16.xpose.msra.mxu0 0
    %352 = vmatpush.bf16.xpose.msra.mxu0 0
    %353 = vmatpush.bf16.xpose.msra.mxu0 0
    %354 = vmatpush.bf16.xpose.msra.mxu0 0
    %355 = vmatpush.bf16.xpose.msra.mxu0 0
    %356 = vmatpush.bf16.xpose.msra.mxu0 0
    %357 = vmatpush.bf16.xpose.msra.mxu0 %v346
    %358 = vmatmul.bf16.gmra.mxu0 %v344
    %v359 = vpop.f32.mrf.mxu0
    %v360 = vadd.f32 0.0, %v359
    %v361 = vpop.f32.mrf.mxu0
    %362 = vdwg.mxu0
    %363 = vmatpush.bf16.xpose.msra.mxu0 0
    %364 = vmatpush.bf16.xpose.msra.mxu0 0
    %365 = vmatpush.bf16.xpose.msra.mxu0 0
    %366 = vmatpush.bf16.xpose.msra.mxu0 0
    %367 = vmatpush.bf16.xpose.msra.mxu0 0
    %368 = vmatpush.bf16.xpose.msra.mxu0 0
    %369 = vmatpush.bf16.xpose.msra.mxu0 0
    %370 = vmatpush.bf16.xpose.msra.mxu0 %v347
    %371 = vmatmul.bf16.gmra.mxu0 %v345
    %v372 = vpop.f32.mrf.mxu0
    %v373 = vadd.f32 0.0, %v372
    %v374 = vpop.f32.mrf.mxu0
    %375 = vdwg.mxu0
    %vm376 = vcmask 64512
    %v377 = vsel %vm376, %v360, -inf
    %378 = vmax.xlane.f32.xlu0 %v377
    %v379 = vpop.xlane.xlu0 %378
    %v380 = vsel %vm376, %v373, -inf
    %381 = vmax.xlane.f32.xlu0 %v380
    %v382 = vpop.xlane.xlu0 %381
    %v383 = vsub.f32 %v360, %v379
    %v384 = vsub.f32 %v373, %v382
    %v385 = vmul.f32 %v383, 1.442695
    %v386 = vpow.pop %v385
    %v387 = vmul.f32 %v384, 1.442695
    %v388 = vpow.pop %v387
    %v389 = vsel %vm376, %v386, 0.0
    %390 = vadd.xlane.f32.xlu0 %v389
    %v391 = vpop.xlane.xlu0 %390
    %v392 = vsel %vm376, %v388, 0.0
    %393 = vadd.xlane.f32.xlu0 %v392
    %v394 = vpop.xlane.xlu0 %393
    %v395 = vrcp.pop %v391
    %v396 = vrcp.pop %v394
    %v397 = vmul.f32 %v386, %v395
    %v398 = vmul.f32 %v388, %v396
    %v399 = vpack.c.bf16 %v397, %v397
    %v400 = vpack.c.bf16 %v398, %v398
    %v402 = vsel %vm376, %v399, 0
    %vm404 = vcmask 1043456
    %v406 = vsel %vm404, %v348, 0
    %408 = vmatpush.bf16.msra.mxu0 0
    %409 = vmatpush.bf16.msra.mxu0 0
    %410 = vmatpush.bf16.msra.mxu0 0
    %411 = vmatpush.bf16.msra.mxu0 0
    %412 = vmatpush.bf16.msra.mxu0 0
    %413 = vmatpush.bf16.msra.mxu0 0
    %414 = vmatpush.bf16.msra.mxu0 0
    %415 = vmatpush.bf16.msra.mxu0 %v406
    %416 = vmatmul.bf16.gmra.mxu0 %v402
    %v417 = vpop.f32.mrf.mxu0
    %v418 = vadd.f32 0.0, %v417
    %v419 = vpop.f32.mrf.mxu0
    %420 = vdwg.mxu0
    %v422 = vsel %vm376, %v400, 0
    %v425 = vsel %vm404, %v349, 0
    %427 = vmatpush.bf16.msra.mxu0 0
    %428 = vmatpush.bf16.msra.mxu0 0
    %429 = vmatpush.bf16.msra.mxu0 0
    %430 = vmatpush.bf16.msra.mxu0 0
    %431 = vmatpush.bf16.msra.mxu0 0
    %432 = vmatpush.bf16.msra.mxu0 0
    %433 = vmatpush.bf16.msra.mxu0 0
    %434 = vmatpush.bf16.msra.mxu0 %v425
    %435 = vmatmul.bf16.gmra.mxu0 %v422
    %v436 = vpop.f32.mrf.mxu0
    %v437 = vadd.f32 0.0, %v436
    %v438 = vpop.f32.mrf.mxu0
    %439 = vdwg.mxu0
    %v440 = vpack.c.bf16 %v437, %v418
    %v441 = vld [vmem:[#allocation7] sm:$0xf]
    %v442 = vld [vmem:[#allocation7 + $0x4] sm:$0xf]
    %v443 = vld [vmem:[#allocation7 + $0x8] sm:$0xf]
    %v444 = vld [vmem:[#allocation7 + $0xc] sm:$0xf]
    %v445 = vld [vmem:[#allocation7 + $0x10] sm:$0xf]
    %v446 = vld [vmem:[#allocation7 + $0x14] sm:$0xf]
    %v447 = vld [vmem:[#allocation7 + $0x18] sm:$0xf]
    %v448 = vld [vmem:[#allocation7 + $0x1c] sm:$0xf]
    %v449 = vld [vmem:[#allocation7 + $0x20] sm:$0xf]
    %v450 = vld [vmem:[#allocation7 + $0x24] sm:$0xf]
    %v451 = vld [vmem:[#allocation7 + $0x28] sm:$0xf]
    %v452 = vld [vmem:[#allocation7 + $0x2c] sm:$0xf]
    %v453 = vld [vmem:[#allocation7 + $0x30] sm:$0xf]
    %v454 = vld [vmem:[#allocation7 + $0x34] sm:$0xf]
    %v455 = vld [vmem:[#allocation7 + $0x38] sm:$0xf]
    %v456 = vld [vmem:[#allocation7 + $0x3c] sm:$0xf]
    %v457 = vperm.slane %v123, 0
    %v474 = vunpack.c.l.b16 %v441
    %v475 = vunpack.c.l.b16 %v442
    %v476 = vunpack.c.l.b16 %v443
    %v477 = vunpack.c.l.b16 %v444
    %v478 = vunpack.c.l.b16 %v445
    %v479 = vunpack.c.l.b16 %v446
    %v480 = vunpack.c.l.b16 %v447
    %v481 = vunpack.c.l.b16 %v448
    %v482 = vunpack.c.l.b16 %v449
    %v483 = vunpack.c.l.b16 %v450
    %v484 = vunpack.c.l.b16 %v451
    %v485 = vunpack.c.l.b16 %v452
    %v486 = vunpack.c.l.b16 %v453
    %v487 = vunpack.c.l.b16 %v454
    %v488 = vunpack.c.l.b16 %v455
    %v489 = vunpack.c.l.b16 %v456
    %v490 = vpack.c.b16 %v475, %v474
    %v491 = vpack.c.b16 %v477, %v476
    %v492 = vpack.c.b16 %v479, %v478
    %v493 = vpack.c.b16 %v481, %v480
    %v494 = vpack.c.b16 %v483, %v482
    %v495 = vpack.c.b16 %v485, %v484
    %v496 = vpack.c.b16 %v487, %v486
    %v497 = vpack.c.b16 %v489, %v488
    %506 = vmatpush.bf16.msra.mxu0 %v497
    %507 = vmatpush.bf16.msra.mxu0 %v496
    %508 = vmatpush.bf16.msra.mxu0 %v495
    %509 = vmatpush.bf16.msra.mxu0 %v494
    %510 = vmatpush.bf16.msra.mxu0 %v493
    %511 = vmatpush.bf16.msra.mxu0 %v492
    %512 = vmatpush.bf16.msra.mxu0 %v491
    %513 = vmatpush.bf16.msra.mxu0 %v490
    %514 = vmatmul.bf16.gmra.mxu0 %v440
    %v515 = vpop.f32.mrf.mxu0
    %v516 = vadd.f32 %v457, %v515
    %v517 = vpop.f32.mrf.mxu0
    %v518 = vadd.f32 %v457, %v517
    %519 = vdwg.mxu0
    %v520 = vunpack.c.l.bf16 %v124
    %v521 = vunpack.c.l.bf16 %v125
    %v522 = vadd.f32 %v520, %v516
    %v523 = vadd.f32 %v521, %v518
    %524 = vadd.xlane.f32.xlu0 %v522
    %v525 = vpop.xlane.xlu0 %524
    %526 = vadd.xlane.f32.xlu0 %v523
    %v527 = vpop.xlane.xlu0 %526
    %v528 = vmul.f32 %v525, 0.03125
    %v529 = vmul.f32 %v527, 0.03125
    %v530 = vsub.f32 %v522, %v528
    %v531 = vsub.f32 %v523, %v529
    %v532 = vperm.slane %v123, 6
    %v533 = vmul.f32 %v530, %v532
    %v534 = vmul.f32 %v531, %v532
    %v535 = vmul.f32 %v533, %v533
    %v536 = vmul.f32 %v534, %v534
    %537 = vadd.xlane.f32.xlu0 %v535
    %v538 = vpop.xlane.xlu0 %537
    %539 = vadd.xlane.f32.xlu0 %v536
    %v540 = vpop.xlane.xlu0 %539
    %v541 = vmul.f32 %v538, 0.03125
    %v542 = vmul.f32 %v540, 0.03125
    %v543 = vadd.f32 %v541, 1e-05
    %v544 = vadd.f32 %v542, 1e-05
    %v545 = vrsqrt.pop %v543
    %v546 = vmul.f32 %v545, %v543
    %v547 = vmul.f32 %v546, %v545
    %v548 = vmul.f32 0.5, %v547
    %v549 = vsub.f32 1.5, %v548
    %v550 = vmul.f32 %v545, %v549
    %vm551 = vweird.f32 %v543
    %vm552 = vweird.f32 %v545
    %vm553 = vmor %vm551, %vm552
    %v554 = vsel %vm553, %v545, %v550
    %v555 = vrsqrt.pop %v544
    %v556 = vmul.f32 %v555, %v544
    %v557 = vmul.f32 %v556, %v555
    %v558 = vmul.f32 0.5, %v557
    %v559 = vsub.f32 1.5, %v558
    %v560 = vmul.f32 %v555, %v559
    %vm561 = vweird.f32 %v544
    %vm562 = vweird.f32 %v555
    %vm563 = vmor %vm561, %vm562
    %v564 = vsel %vm563, %v555, %v560
    %v565 = vmul.f32 %v533, %v554
    %v566 = vmul.f32 %v534, %v564
    %v567 = vperm.slane %v123, 2
    %v568 = vmul.f32 %v565, %v567
    %v569 = vmul.f32 %v566, %v567
    %v570 = vperm.slane %v123, 3
    %v571 = vadd.f32 %v568, %v570
    %v572 = vadd.f32 %v569, %v570
    %v573 = vpack.c.bf16 %v572, %v571
    %v574 = vld [vmem:[#allocation8] sm:$0xf]
    %v575 = vld [vmem:[#allocation8 + $0x4] sm:$0xf]
    %v576 = vld [vmem:[#allocation8 + $0x8] sm:$0xf]
    %v577 = vld [vmem:[#allocation8 + $0xc] sm:$0xf]
    %v578 = vld [vmem:[#allocation8 + $0x10] sm:$0xf]
    %v579 = vld [vmem:[#allocation8 + $0x14] sm:$0xf]
    %v580 = vld [vmem:[#allocation8 + $0x18] sm:$0xf]
    %v581 = vld [vmem:[#allocation8 + $0x1c] sm:$0xf]
    %v582 = vld [vmem:[#allocation8 + $0x20] sm:$0xf]
    %v583 = vld [vmem:[#allocation8 + $0x24] sm:$0xf]
    %v584 = vld [vmem:[#allocation8 + $0x28] sm:$0xf]
    %v585 = vld [vmem:[#allocation8 + $0x2c] sm:$0xf]
    %v586 = vld [vmem:[#allocation8 + $0x30] sm:$0xf]
    %v587 = vld [vmem:[#allocation8 + $0x34] sm:$0xf]
    %v588 = vld [vmem:[#allocation8 + $0x38] sm:$0xf]
    %v589 = vld [vmem:[#allocation8 + $0x3c] sm:$0xf]
    %v590 = vld [vmem:[%s6] sm:$0x1]
    %v592 = vperm.slane %v590, 0
    %v610 = vunpack.c.l.b16 %v574
    %v611 = vunpack.c.l.b16 %v575
    %v612 = vunpack.c.l.b16 %v576
    %v613 = vunpack.c.l.b16 %v577
    %v614 = vunpack.c.l.b16 %v578
    %v615 = vunpack.c.l.b16 %v579
    %v616 = vunpack.c.l.b16 %v580
    %v617 = vunpack.c.l.b16 %v581
    %v618 = vunpack.c.l.b16 %v582
    %v619 = vunpack.c.l.b16 %v583
    %v620 = vunpack.c.l.b16 %v584
    %v621 = vunpack.c.l.b16 %v585
    %v622 = vunpack.c.l.b16 %v586
    %v623 = vunpack.c.l.b16 %v587
    %v624 = vunpack.c.l.b16 %v588
    %v625 = vunpack.c.l.b16 %v589
    %v626 = vpack.c.b16 %v611, %v610
    %v627 = vpack.c.b16 %v613, %v612
    %v628 = vpack.c.b16 %v615, %v614
    %v629 = vpack.c.b16 %v617, %v616
    %v630 = vpack.c.b16 %v619, %v618
    %v631 = vpack.c.b16 %v621, %v620
    %v632 = vpack.c.b16 %v623, %v622
    %v633 = vpack.c.b16 %v625, %v624
    %642 = vmatpush.bf16.msra.mxu0 %v633
    %643 = vmatpush.bf16.msra.mxu0 %v632
    %644 = vmatpush.bf16.msra.mxu0 %v631
    %645 = vmatpush.bf16.msra.mxu0 %v630
    %646 = vmatpush.bf16.msra.mxu0 %v629
    %647 = vmatpush.bf16.msra.mxu0 %v628
    %648 = vmatpush.bf16.msra.mxu0 %v627
    %649 = vmatpush.bf16.msra.mxu0 %v626
    %650 = vmatmul.bf16.gmra.mxu0 %v573
    %v651 = vpop.f32.mrf.mxu0
    %v652 = vadd.f32 %v592, %v651
    %v653 = vpop.f32.mrf.mxu0
    %v654 = vadd.f32 %v592, %v653
    %655 = vdwg.mxu0
    %v656 = vmax.f32 %v652, 0.0
    %v657 = vmax.f32 %v654, 0.0
    %v658 = vpack.c.bf16 %v657, %v656
    %v659 = vld [vmem:[#allocation10] sm:$0xf]
    %v660 = vld [vmem:[#allocation10 + $0x4] sm:$0xf]
    %v661 = vld [vmem:[#allocation10 + $0x8] sm:$0xf]
    %v662 = vld [vmem:[#allocation10 + $0xc] sm:$0xf]
    %v663 = vld [vmem:[#allocation10 + $0x10] sm:$0xf]
    %v664 = vld [vmem:[#allocation10 + $0x14] sm:$0xf]
    %v665 = vld [vmem:[#allocation10 + $0x18] sm:$0xf]
    %v666 = vld [vmem:[#allocation10 + $0x1c] sm:$0xf]
    %v667 = vld [vmem:[#allocation10 + $0x20] sm:$0xf]
    %v668 = vld [vmem:[#allocation10 + $0x24] sm:$0xf]
    %v669 = vld [vmem:[#allocation10 + $0x28] sm:$0xf]
    %v670 = vld [vmem:[#allocation10 + $0x2c] sm:$0xf]
    %v671 = vld [vmem:[#allocation10 + $0x30] sm:$0xf]
    %v672 = vld [vmem:[#allocation10 + $0x34] sm:$0xf]
    %v673 = vld [vmem:[#allocation10 + $0x38] sm:$0xf]
    %v674 = vld [vmem:[#allocation10 + $0x3c] sm:$0xf]
    %v675 = vperm.slane %v123, 1
    %v692 = vunpack.c.l.b16 %v659
    %v693 = vunpack.c.l.b16 %v660
    %v694 = vunpack.c.l.b16 %v661
    %v695 = vunpack.c.l.b16 %v662
    %v696 = vunpack.c.l.b16 %v663
    %v697 = vunpack.c.l.b16 %v664
    %v698 = vunpack.c.l.b16 %v665
    %v699 = vunpack.c.l.b16 %v666
    %v700 = vunpack.c.l.b16 %v667
    %v701 = vunpack.c.l.b16 %v668
    %v702 = vunpack.c.l.b16 %v669
    %v703 = vunpack.c.l.b16 %v670
    %v704 = vunpack.c.l.b16 %v671
    %v705 = vunpack.c.l.b16 %v672
    %v706 = vunpack.c.l.b16 %v673
    %v707 = vunpack.c.l.b16 %v674
    %v708 = vpack.c.b16 %v693, %v692
    %v709 = vpack.c.b16 %v695, %v694
    %v710 = vpack.c.b16 %v697, %v696
    %v711 = vpack.c.b16 %v699, %v698
    %v712 = vpack.c.b16 %v701, %v700
    %v713 = vpack.c.b16 %v703, %v702
    %v714 = vpack.c.b16 %v705, %v704
    %v715 = vpack.c.b16 %v707, %v706
    %724 = vmatpush.bf16.msra.mxu0 %v715
    %725 = vmatpush.bf16.msra.mxu0 %v714
    %726 = vmatpush.bf16.msra.mxu0 %v713
    %727 = vmatpush.bf16.msra.mxu0 %v712
    %728 = vmatpush.bf16.msra.mxu0 %v711
    %729 = vmatpush.bf16.msra.mxu0 %v710
    %730 = vmatpush.bf16.msra.mxu0 %v709
    %731 = vmatpush.bf16.msra.mxu0 %v708
    %732 = vmatmul.bf16.gmra.mxu0 %v658
    %v733 = vpop.f32.mrf.mxu0
    %v734 = vadd.f32 %v675, %v733
    %v735 = vpop.f32.mrf.mxu0
    %v736 = vadd.f32 %v675, %v735
    %737 = vdwg.mxu0
    %v738 = vadd.f32 %v571, %v734
    %v739 = vadd.f32 %v572, %v736
    %740 = vadd.xlane.f32.xlu0 %v738
    %v741 = vpop.xlane.xlu0 %740
    %742 = vadd.xlane.f32.xlu0 %v739
    %v743 = vpop.xlane.xlu0 %742
    %v744 = vmul.f32 %v741, 0.03125
    %v745 = vmul.f32 %v743, 0.03125
    %v746 = vsub.f32 %v738, %v744
    %v747 = vsub.f32 %v739, %v745
    %v748 = vmul.f32 %v746, %v532
    %v749 = vmul.f32 %v747, %v532
    %v750 = vmul.f32 %v748, %v748
    %v751 = vmul.f32 %v749, %v749
    %752 = vadd.xlane.f32.xlu0 %v750
    %v753 = vpop.xlane.xlu0 %752
    %754 = vadd.xlane.f32.xlu0 %v751
    %v755 = vpop.xlane.xlu0 %754
    %v756 = vmul.f32 %v753, 0.03125
    %v757 = vmul.f32 %v755, 0.03125
    %v758 = vadd.f32 %v756, 1e-05
    %v759 = vadd.f32 %v757, 1e-05
    %v760 = vrsqrt.pop %v758
    %v761 = vmul.f32 %v760, %v758
    %v762 = vmul.f32 %v761, %v760
    %v763 = vmul.f32 0.5, %v762
    %v764 = vsub.f32 1.5, %v763
    %v765 = vmul.f32 %v760, %v764
    %vm766 = vweird.f32 %v758
    %vm767 = vweird.f32 %v760
    %vm768 = vmor %vm766, %vm767
    %v769 = vsel %vm768, %v760, %v765
    %v770 = vrsqrt.pop %v759
    %v771 = vmul.f32 %v770, %v759
    %v772 = vmul.f32 %v771, %v770
    %v773 = vmul.f32 0.5, %v772
    %v774 = vsub.f32 1.5, %v773
    %v775 = vmul.f32 %v770, %v774
    %vm776 = vweird.f32 %v759
    %vm777 = vweird.f32 %v770
    %vm778 = vmor %vm776, %vm777
    %v779 = vsel %vm778, %v770, %v775
    %v780 = vmul.f32 %v748, %v769
    %v781 = vmul.f32 %v749, %v779
    %v782 = vperm.slane %v123, 4
    %v783 = vmul.f32 %v780, %v782
    %v784 = vmul.f32 %v781, %v782
    %v785 = vperm.slane %v123, 5
    %v786 = vadd.f32 %v783, %v785
    %v787 = vadd.f32 %v784, %v785
    %788 = vst [vmem:[#allocation13] sm:$0xff] %v786
    %789 = vst [vmem:[#allocation13 + $0x8] sm:$0xff] %v787
    // Predicated region
    $region58: #{tpu_custom_call.1} parent=1 // pred_check
      _
    $region59: #{tpu_custom_call.1} parent=1 // pred_check_branch
      %791 = sbr.rel (0) target = $region61
    $region60: #{tpu_custom_call.1} parent=1 // pred_region
      %793 = vsyncadd [#allocation4], 0
      %s794 = sshll.u32 [#allocation13], 4
      %s795 = int_to_ptr.vmem [resolvable:$true] %s794
      %s796 = sshll.u32 %s8, 4
      %s797 = int_to_ptr.hbm [resolvable:$true] %s796
      %802 = dma.vmem_to_hbm [thread:$0]  %s795, 256, %s797, [#allocation4], 128, 128, 8
    $region61: #{tpu_custom_call.1} parent=1 // pred_fallthru
      _
    // Predicated region
    $region62: #{tpu_custom_call.1} parent=1 // pred_check
      _
    $region63: #{tpu_custom_call.1} parent=1 // pred_check_branch
      %804 = sbr.rel (0) target = $region65
    $region64: #{tpu_custom_call.1} parent=1 // pred_region
      %806 = dma.done [#allocation4], 256
    $region65: #{tpu_custom_call.1} parent=1 // pred_fallthru
      _
    %807 = vsyncpa [#allocation3], 1
    %808 = vsyncpa [#allocation6], 1
    %809 = vsyncpa [#allocation9], 1
    %810 = vsyncpa [#allocation12], 1
    %811 = vsyncpa [#allocation4], 1

</llo_original>
